<compile_context>
chip_gen: v6e
topology: v6e:2x2x1
jax: 0.10.0
libtpu: 0.0.40
codegen_flags: <defaults>
</compile_context>

<pallas_src>
import functools

import jax
import jax.numpy as jnp
from jax.experimental import pallas as pl
from jax.experimental.pallas import tpu as pltpu

# ~16K rows per block: ~2 MiB raw f32 per (rows, 32) input block.
_TARGET_ROWS_PER_BLOCK = 16384


def attm_kernel(t1_ref, t2_ref, wt_ref, b_ref, o_ref, *, l2):
    rows, _ = t1_ref.shape            # rows = bb * L1 * L2
    bb, l12 = o_ref.shape             # (batch block, L1*L2)

    t1 = t1_ref[...]
    t2 = t2_ref[...]

    # Linear: wt_ref is W^T (in, out), so this is x @ W^T of nn.Linear.
    # Bias rides a cheap broadcast VALU add (hoisted once per block), not a
    # second MXU matmul.
    y = jnp.dot(t1, wt_ref[...], preferred_element_type=jnp.float32)   # (rows, H)
    y = y + b_ref[...]                                                  # (1, H) bcast

    # score per row = sum_h((x @ W^T + b) * t2)
    s = jnp.sum(y * t2, axis=-1, keepdims=True)                         # (rows, 1)

    # Numerically-stable softmax over groups of l2 consecutive rows
    # (== dim=2 of the (B, L1, L2) score tensor).
    s = s.reshape(rows // l2, l2)                                       # (bb*L1, L2)
    m = jnp.max(s, axis=-1, keepdims=True)
    e = jnp.exp(s - m)
    p = e / jnp.sum(e, axis=-1, keepdims=True)                          # exact normalize

    # Lane-dense store: trailing dim L1*L2 instead of L2.
    o_ref[...] = p.reshape(bb, l12).astype(o_ref.dtype)


def attm_forward(team1, team2, W, b, length1, length2, hidden_dim,
                 block_batch=None):
    """AttM forward.

    team1/team2: any shape reshapable to (-1, L1, L2, H) (f32).
    W: PyTorch nn.Linear weight, (out, in) = (H, H).  b: (H,).
    Returns softmax probabilities of shape (B, L1*L2), f32.
    """
    l12 = length1 * length2
    # Flatten in XLA (free, contiguous) so the kernel only ever sees 2-D blocks.
    t1 = team1.reshape(-1, hidden_dim)        # (B*L1*L2, H)
    t2 = team2.reshape(-1, hidden_dim)
    n = t1.shape[0]
    assert n % l12 == 0, "input not reshapable to (-1, L1, L2, H)"
    batch = n // l12

    wt = W.T                                   # (in, out): no in-kernel transpose
    b_row = b.reshape(1, hidden_dim)

    # --- block sizing -------------------------------------------------------
    # Default: ~16K rows/block => ~2 MiB raw f32 per input block (~8 MiB after
    # 32->128 lane padding in VMEM); with 2 inputs x 2 pipeline buffers that is
    # ~32 MiB, inside the 48 MiB limit below on every generation
    # (v5e/v6e: 128 MiB physical VMEM, v7x: 64 MiB/TC).  Big batches then give
    # many grid steps so "parallel" can shard across v7x's two TensorCores.
    if block_batch is None:
        bb = max(8, (_TARGET_ROWS_PER_BLOCK // l12) // 8 * 8)
    else:
        bb = int(block_batch)
    if bb >= batch:
        bb = batch            # single full-extent block (no alignment constraint)
    elif bb % 8 != 0:
        raise ValueError(
            "block_batch must be a multiple of 8 when smaller than the batch "
            f"(got {bb})")

    rows_blk = bb * l12
    # Ragged tail handled by the boundary block (clamped/masked by Pallas);
    # rows are independent, so no jnp.pad copy of the inputs is needed.
    grid = (pl.cdiv(batch, bb),)

    return pl.pallas_call(
        functools.partial(attm_kernel, l2=length2),
        out_shape=jax.ShapeDtypeStruct((batch, l12), jnp.float32),
        grid_spec=pltpu.PrefetchScalarGridSpec(
            num_scalar_prefetch=0,
            grid=grid,
            in_specs=[
                pl.BlockSpec((rows_blk, hidden_dim), lambda i: (i, 0)),
                pl.BlockSpec((rows_blk, hidden_dim), lambda i: (i, 0)),
                pl.BlockSpec((hidden_dim, hidden_dim), lambda i: (0, 0)),
                pl.BlockSpec((1, hidden_dim), lambda i: (0, 0)),
            ],
            out_specs=pl.BlockSpec((bb, l12), lambda i: (i, 0)),
        ),
        compiler_params=pltpu.CompilerParams(
            dimension_semantics=("parallel",),
            vmem_limit_bytes=48 * 1024 * 1024,
        ),
    )(t1, t2, wt, b_row)


def reference_forward(team1, team2, W, b, length1, length2, hidden_dim):
    t1 = team1.reshape(-1, length1, length2, hidden_dim).astype(jnp.float32)
    t2 = team2.reshape(-1, length1, length2, hidden_dim).astype(jnp.float32)
    y = jnp.einsum("blkh,gh->blkg", t1, W) + b
    s = jnp.sum(y * t2, axis=3)
    p = jax.nn.softmax(s, axis=2)
    return p.reshape(-1, length1 * length2)


if __name__ == "__main__":
    # Module config: n_hero=8, length=5, hidden_dim=32, reduce=False
    length = 5
    length1, length2 = length, length
    hidden_dim = 32

    key = jax.random.PRNGKey(0)
    k1, k2, kw, kb, k3, k4, k5, k6 = jax.random.split(key, 8)

    def bf16_round(x):
        # Pre-round to bf16-representable f32 so the kernel-vs-reference check
        # does not depend on the backend's default matmul precision; the kernel
        # itself streams and accumulates in f32.
        return x.astype(jnp.bfloat16).astype(jnp.float32)

    # Deterministic parameter init (synthetic, not a checkpoint load).
    W = bf16_round(jax.random.normal(kw, (hidden_dim, hidden_dim), jnp.float32) * 0.1)
    b = bf16_round(jax.random.normal(kb, (hidden_dim,), jnp.float32) * 0.1)

    def run_case(ka, kb2, batch, block_batch=None):
        t1 = bf16_round(jax.random.normal(
            ka, (batch, length1, length2, hidden_dim), jnp.float32))
        t2 = bf16_round(jax.random.normal(
            kb2, (batch, length1, length2, hidden_dim), jnp.float32))
        out = jax.block_until_ready(
            attm_forward(t1, t2, W, b, length1, length2, hidden_dim,
                         block_batch=block_batch))
        ref = reference_forward(t1, t2, W, b, length1, length2, hidden_dim)
        assert out.shape == (batch, length1 * length2)
        err = float(jnp.max(jnp.abs(out - ref)))
        assert jnp.allclose(out, ref, atol=2e-4, rtol=2e-4), (
            f"mismatch vs reference (batch={batch}, block_batch={block_batch}, "
            f"max|diff|={err})")
        # Exact normalization: each L2 softmax group sums to 1.
        row_sums = out.reshape(batch, length1, length2).sum(axis=2)
        assert jnp.allclose(row_sums, 1.0, atol=1e-5), "softmax rows not normalized"

    run_case(k1, k2, batch=2)                    # single-block path (bb == batch)
    run_case(k3, k4, batch=24, block_batch=8)    # gridded path, grid=(3,), even split
    run_case(k5, k6, batch=20, block_batch=8)    # gridded ragged tail, no jnp.pad copy

    print("KERNEL_OK")
</pallas_src>

<mosaic_0001>
module attributes {stable_mosaic.version = 11 : i64} {
  func.func @attm_kernel(%arg0: i32, %arg1: memref<50x32xf32, #tpu.memory_space<vmem>>, %arg2: memref<50x32xf32, #tpu.memory_space<vmem>>, %arg3: memref<32x32xf32, #tpu.memory_space<vmem>>, %arg4: memref<1x32xf32, #tpu.memory_space<vmem>>, %arg5: memref<2x25xf32, #tpu.memory_space<vmem>>) attributes {dimension_semantics = [#tpu.dimension_semantics<parallel>], iteration_bounds = array<i64: 1>, scalar_prefetch = 0 : i64, scratch_operands = 0 : i64, tpu.core_type = #tpu.core_type<tc>, window_params = [{transform_indices = @transform_0, window_bounds = array<i64: 50, 32>}, {transform_indices = @transform_1, window_bounds = array<i64: 50, 32>}, {pipeline_mode = #tpu.pipeline_mode<synchronous>, transform_indices = @transform_2, window_bounds = array<i64: 32, 32>}, {pipeline_mode = #tpu.pipeline_mode<synchronous>, transform_indices = @transform_3, window_bounds = array<i64: 1, 32>}, {transform_indices = @transform_4, window_bounds = array<i64: 2, 25>}]} {
    %c0 = arith.constant 0 : index
    %c0_0 = arith.constant 0 : index
    %0 = vector.load %arg1[%c0, %c0_0] : memref<50x32xf32, #tpu.memory_space<vmem>>, vector<50x32xf32>
    %c0_1 = arith.constant 0 : index
    %c0_2 = arith.constant 0 : index
    %1 = vector.load %arg2[%c0_1, %c0_2] : memref<50x32xf32, #tpu.memory_space<vmem>>, vector<50x32xf32>
    %c0_3 = arith.constant 0 : index
    %c0_4 = arith.constant 0 : index
    %2 = vector.load %arg3[%c0_3, %c0_4] : memref<32x32xf32, #tpu.memory_space<vmem>>, vector<32x32xf32>
    %cst = arith.constant dense<0.000000e+00> : vector<50x32xf32>
    %3 = tpu.matmul %0, %2, %cst {dimension_numbers = #tpu.dot_dimension_numbers<[1], [0], [0], [1], [0, 0, 1, 1], [], []>} : vector<50x32xf32>, vector<32x32xf32>, vector<50x32xf32> -> vector<50x32xf32>
    %c0_5 = arith.constant 0 : index
    %c0_6 = arith.constant 0 : index
    %4 = vector.load %arg4[%c0_5, %c0_6] : memref<1x32xf32, #tpu.memory_space<vmem>>, vector<1x32xf32>
    %5 = vector.broadcast %4 : vector<1x32xf32> to vector<50x32xf32>
    %6 = arith.addf %3, %5 : vector<50x32xf32>
    %7 = arith.mulf %6, %1 : vector<50x32xf32>
    %cst_7 = arith.constant dense<0.000000e+00> : vector<50xf32>
    %8 = vector.multi_reduction <add>, %7, %cst_7 [1] : vector<50x32xf32> to vector<50xf32>
    %9 = vector.shape_cast %8 : vector<50xf32> to vector<50x1xf32>
    %10 = vector.shape_cast %9 : vector<50x1xf32> to vector<10x5xf32>
    %cst_8 = arith.constant dense<0xFF800000> : vector<10xf32>
    %11 = vector.multi_reduction <maximumf>, %10, %cst_8 [1] : vector<10x5xf32> to vector<10xf32>
    %12 = vector.shape_cast %11 : vector<10xf32> to vector<10x1xf32>
    %13 = vector.broadcast %12 : vector<10x1xf32> to vector<10x5xf32>
    %14 = arith.subf %10, %13 : vector<10x5xf32>
    %15 = math.exp %14 : vector<10x5xf32>
    %cst_9 = arith.constant dense<0.000000e+00> : vector<10xf32>
    %16 = vector.multi_reduction <add>, %15, %cst_9 [1] : vector<10x5xf32> to vector<10xf32>
    %17 = vector.shape_cast %16 : vector<10xf32> to vector<10x1xf32>
    %18 = vector.broadcast %17 : vector<10x1xf32> to vector<10x5xf32>
    %19 = arith.divf %15, %18 : vector<10x5xf32>
    %20 = vector.shape_cast %19 : vector<10x5xf32> to vector<2x25xf32>
    %c0_10 = arith.constant 0 : index
    %c0_11 = arith.constant 0 : index
    %21 = vector.load %arg5[%c0_10, %c0_11] : memref<2x25xf32, #tpu.memory_space<vmem>>, vector<2x25xf32>
    tpu.vector_store %arg5[%c0_10, %c0_11], %20 {strides = array<i32>} : memref<2x25xf32, #tpu.memory_space<vmem>>, vector<2x25xf32>,
    return
  }
  func.func @transform_0(%arg0: i32) -> (i32, i32) {
    %c0_i32 = arith.constant 0 : i32
    %c0_i32_0 = arith.constant 0 : i32
    return %arg0, %c0_i32 : i32, i32
  }
  func.func @transform_1(%arg0: i32) -> (i32, i32) {
    %c0_i32 = arith.constant 0 : i32
    %c0_i32_0 = arith.constant 0 : i32
    return %arg0, %c0_i32 : i32, i32
  }
  func.func @transform_2(%arg0: i32) -> (i32, i32) {
    %c0_i32 = arith.constant 0 : i32
    %c0_i32_0 = arith.constant 0 : i32
    %c0_i32_1 = arith.constant 0 : i32
    return %c0_i32, %c0_i32_0 : i32, i32
  }
  func.func @transform_3(%arg0: i32) -> (i32, i32) {
    %c0_i32 = arith.constant 0 : i32
    %c0_i32_0 = arith.constant 0 : i32
    %c0_i32_1 = arith.constant 0 : i32
    return %c0_i32, %c0_i32_0 : i32, i32
  }
  func.func @transform_4(%arg0: i32) -> (i32, i32) {
    %c0_i32 = arith.constant 0 : i32
    %c0_i32_0 = arith.constant 0 : i32
    return %arg0, %c0_i32 : i32, i32
  }
}

</mosaic_0001>

<llo_original>
// kernel: tpu_custom_call.1
$region0: #{tpu_custom_call.1}
  #allocation0 [shape = 'u32[]', space=smem, size = 0x4, offset = 0x4, fixed_abs, tag = 'smem constant byte address 0x4 - core index']
  #allocation1 [shape = 'u32[144,128]{1,0:T(1,128)}', space=vmem, size = 0x12000, scoped, tag = 'internal scratch']
  %s0 = inlined_call_operand.vmem [shape: f32[50,32], index: 0, kind: input, shape index: {}]
  %s1 = inlined_call_operand.vmem [shape: f32[50,32], index: 1, kind: input, shape index: {}]
  %s2 = inlined_call_operand.vmem [shape: f32[32,32], index: 2, kind: input, shape index: {}]
  %s3 = inlined_call_operand.vmem [shape: f32[1,32], index: 3, kind: input, shape index: {}]
  %s4 = inlined_call_operand.hbm [shape: f32[2,25], index: 4, kind: output, shape index: {}]
  %s5 = sld [smem:[#allocation0]]
  $region26: #{tpu_custom_call.1} parent=0
    _
  %s7 = ssub.s32 1, %s5
  %s8 = scalar_select 0, %s7, %s5
  $region1: #{tpu_custom_call.1} parent=0
    #allocation2 [shape = 'u8[1024]{0}', space=vmem, size = 0x400, scoped, tag = 'output window, operand 0, single buffered']
    #allocation3 [shape = 's32[1]{0}', space=sflag, size = 0x4, scoped, tag = 'scoped memory for tpu_custom_call.1']
    %9 = vsyncpa [#allocation3], 0
    // Predicated region
    $region2: #{tpu_custom_call.1} parent=1 // pred_check
      _
    $region3: #{tpu_custom_call.1} parent=1 // pred_check_branch
      %11 = sbr.rel (0) target = $region5
    $region4: #{tpu_custom_call.1} parent=1 // pred_region
      _
    $region5: #{tpu_custom_call.1} parent=1 // pred_fallthru
      _
    // Predicated region
    $region6: #{tpu_custom_call.1} parent=1 // pred_check
      _
    $region7: #{tpu_custom_call.1} parent=1 // pred_check_branch
      %13 = sbr.rel (0) target = $region9
    $region8: #{tpu_custom_call.1} parent=1 // pred_region
      _
    $region9: #{tpu_custom_call.1} parent=1 // pred_fallthru
      _
    // Predicated region
    $region10: #{tpu_custom_call.1} parent=1 // pred_check
      _
    $region11: #{tpu_custom_call.1} parent=1 // pred_check_branch
      %15 = sbr.rel (0) target = $region13
    $region12: #{tpu_custom_call.1} parent=1 // pred_region
      _
    $region13: #{tpu_custom_call.1} parent=1 // pred_fallthru
      _
    // Predicated region
    $region14: #{tpu_custom_call.1} parent=1 // pred_check
      _
    $region15: #{tpu_custom_call.1} parent=1 // pred_check_branch
      %17 = sbr.rel (0) target = $region17
    $region16: #{tpu_custom_call.1} parent=1 // pred_region
      _
    $region17: #{tpu_custom_call.1} parent=1 // pred_fallthru
      _
    %v18 = vld [vmem:[%s0] sm:$0xff]
    %v19 = vld [vmem:[%s0 + $0x8] sm:$0xff]
    %v20 = vld [vmem:[%s0 + $0x10] sm:$0xff]
    %v21 = vld [vmem:[%s0 + $0x18] sm:$0xff]
    %v22 = vld [vmem:[%s0 + $0x20] sm:$0xff]
    %v23 = vld [vmem:[%s0 + $0x28] sm:$0xff]
    %v24 = vld [vmem:[%s0 + $0x30] sm:$0x3]
    %v25 = vld [vmem:[%s1] sm:$0xff]
    %v26 = vld [vmem:[%s1 + $0x8] sm:$0xff]
    %v27 = vld [vmem:[%s1 + $0x10] sm:$0xff]
    %v28 = vld [vmem:[%s1 + $0x18] sm:$0xff]
    %v29 = vld [vmem:[%s1 + $0x20] sm:$0xff]
    %v30 = vld [vmem:[%s1 + $0x28] sm:$0xff]
    %v31 = vld [vmem:[%s1 + $0x30] sm:$0x3]
    %v32 = vld [vmem:[%s2] sm:$0xff]
    %v33 = vld [vmem:[%s2 + $0x8] sm:$0xff]
    %v34 = vld [vmem:[%s2 + $0x10] sm:$0xff]
    %v35 = vld [vmem:[%s2 + $0x18] sm:$0xff]
    %v36 = vld [vmem:[%s3] sm:$0x1]
    %v38 = vlaneseq
    %v39 = vshrl.u32 %v38, 7
    %v40 = vsub.s32 0, %v39
    %v41 = vrot.slane %v36, %v40
    %vm43 = vcmask 261120
    %v45 = vsel %vm43, %v18, 0
    %v48 = vsel %vm43, %v19, 0
    %v51 = vsel %vm43, %v20, 0
    %v54 = vsel %vm43, %v21, 0
    %v57 = vsel %vm43, %v22, 0
    %v60 = vsel %vm43, %v23, 0
    %v63 = vsel %vm43, %v24, 0
    %65 = vmatprep.subr.mxu0 0.0
    %66 = vmatpush1.msra.mxu0 0.0
    %67 = vmatprep.subr.mxu0 0.0
    %68 = vmatpush1.msra.mxu0 0.0
    %69 = vmatprep.subr.mxu0 0.0
    %70 = vmatpush1.msra.mxu0 0.0
    %71 = vmatprep.subr.mxu0 0.0
    %72 = vmatpush1.msra.mxu0 0.0
    %73 = vmatprep.subr.mxu0 0.0
    %74 = vmatpush1.msra.mxu0 0.0
    %75 = vmatprep.subr.mxu0 0.0
    %76 = vmatpush1.msra.mxu0 0.0
    %77 = vmatprep.subr.mxu0 0.0
    %78 = vmatpush1.msra.mxu0 0.0
    %79 = vmatprep.subr.mxu0 0.0
    %80 = vmatpush1.msra.mxu0 0.0
    %81 = vmatprep.subr.mxu0 0.0
    %82 = vmatpush1.msra.mxu0 0.0
    %83 = vmatprep.subr.mxu0 0.0
    %84 = vmatpush1.msra.mxu0 0.0
    %85 = vmatprep.subr.mxu0 0.0
    %86 = vmatpush1.msra.mxu0 0.0
    %87 = vmatprep.subr.mxu0 0.0
    %88 = vmatpush1.msra.mxu0 0.0
    %89 = vmatprep.subr.mxu0 0.0
    %90 = vmatpush1.msra.mxu0 %v35
    %91 = vmatprep.subr.mxu0 0.0
    %92 = vmatpush1.msra.mxu0 %v34
    %93 = vmatprep.subr.mxu0 0.0
    %94 = vmatpush1.msra.mxu0 %v33
    %95 = vmatprep.subr.mxu0 0.0
    %96 = vmatpush1.msra.mxu0 %v32
    %97 = vmatprep.subr.mxu0 0.0
    %98 = vmatpush2.msra.mxu0 0.0
    %99 = vmatprep.subr.mxu0 0.0
    %100 = vmatpush2.msra.mxu0 0.0
    %101 = vmatprep.subr.mxu0 0.0
    %102 = vmatpush2.msra.mxu0 0.0
    %103 = vmatprep.subr.mxu0 0.0
    %104 = vmatpush2.msra.mxu0 0.0
    %105 = vmatprep.subr.mxu0 0.0
    %106 = vmatpush2.msra.mxu0 0.0
    %107 = vmatprep.subr.mxu0 0.0
    %108 = vmatpush2.msra.mxu0 0.0
    %109 = vmatprep.subr.mxu0 0.0
    %110 = vmatpush2.msra.mxu0 0.0
    %111 = vmatprep.subr.mxu0 0.0
    %112 = vmatpush2.msra.mxu0 0.0
    %113 = vmatprep.subr.mxu0 0.0
    %114 = vmatpush2.msra.mxu0 0.0
    %115 = vmatprep.subr.mxu0 0.0
    %116 = vmatpush2.msra.mxu0 0.0
    %117 = vmatprep.subr.mxu0 0.0
    %118 = vmatpush2.msra.mxu0 0.0
    %119 = vmatprep.subr.mxu0 0.0
    %120 = vmatpush2.msra.mxu0 0.0
    %121 = vmatprep.subr.mxu0 0.0
    %122 = vmatpush2.msra.mxu0 0.0
    %123 = vmatprep.subr.mxu0 0.0
    %124 = vmatpush2.msra.mxu0 0.0
    %125 = vmatprep.subr.mxu0 0.0
    %126 = vmatpush2.msra.mxu0 0.0
    %127 = vmatprep.subr.mxu0 0.0
    %128 = vmatpush2.msra.mxu0 0.0
    %129 = vmatprep.mubr.f32.mxu0 0.0
    %130 = vmatmul.mubr.f32.gmra.mxu0 %v45
    %v131 = vpop.f32.mrf.mxu0
    %v132 = vadd.f32 %v41, %v131
    %v133 = vpop.f32.mrf.mxu0
    %134 = vmatprep.mubr.f32.mxu0 0.0
    %135 = vmatmul.mubr.f32.gmra.mxu0 %v48
    %v136 = vpop.f32.mrf.mxu0
    %v137 = vadd.f32 %v41, %v136
    %v138 = vpop.f32.mrf.mxu0
    %139 = vmatprep.mubr.f32.mxu0 0.0
    %140 = vmatmul.mubr.f32.gmra.mxu0 %v51
    %v141 = vpop.f32.mrf.mxu0
    %v142 = vadd.f32 %v41, %v141
    %v143 = vpop.f32.mrf.mxu0
    %144 = vmatprep.mubr.f32.mxu0 0.0
    %145 = vmatmul.mubr.f32.gmra.mxu0 %v54
    %v146 = vpop.f32.mrf.mxu0
    %v147 = vadd.f32 %v41, %v146
    %v148 = vpop.f32.mrf.mxu0
    %149 = vmatprep.mubr.f32.mxu0 0.0
    %150 = vmatmul.mubr.f32.gmra.mxu0 %v57
    %v151 = vpop.f32.mrf.mxu0
    %v152 = vadd.f32 %v41, %v151
    %v153 = vpop.f32.mrf.mxu0
    %154 = vmatprep.mubr.f32.mxu0 0.0
    %155 = vmatmul.mubr.f32.gmra.mxu0 %v60
    %v156 = vpop.f32.mrf.mxu0
    %v157 = vadd.f32 %v41, %v156
    %v158 = vpop.f32.mrf.mxu0
    %159 = vmatprep.mubr.f32.mxu0 0.0
    %160 = vmatmul.mubr.f32.gmra.mxu0 %v63
    %v161 = vpop.f32.mrf.mxu0
    %v162 = vadd.f32 %v41, %v161
    %v163 = vpop.f32.mrf.mxu0
    %164 = vdwg.mxu0
    %v165 = vmul.f32 %v132, %v25
    %v166 = vmul.f32 %v137, %v26
    %v167 = vmul.f32 %v142, %v27
    %v168 = vmul.f32 %v147, %v28
    %v169 = vmul.f32 %v152, %v29
    %v170 = vmul.f32 %v157, %v30
    %v171 = vmul.f32 %v162, %v31
    %v172 = vsel %vm43, %v165, 0.0
    %173 = vadd.xlane.f32.xlu0 %v172
    %v174 = vpop.xlane.xlu0 %173
    %v175 = vsel %vm43, %v166, 0.0
    %176 = vadd.xlane.f32.xlu0 %v175
    %v177 = vpop.xlane.xlu0 %176
    %v178 = vsel %vm43, %v167, 0.0
    %179 = vadd.xlane.f32.xlu0 %v178
    %v180 = vpop.xlane.xlu0 %179
    %v181 = vsel %vm43, %v168, 0.0
    %182 = vadd.xlane.f32.xlu0 %v181
    %v183 = vpop.xlane.xlu0 %182
    %v184 = vsel %vm43, %v169, 0.0
    %185 = vadd.xlane.f32.xlu0 %v184
    %v186 = vpop.xlane.xlu0 %185
    %v187 = vsel %vm43, %v170, 0.0
    %188 = vadd.xlane.f32.xlu0 %v187
    %v189 = vpop.xlane.xlu0 %188
    %vm190 = vcmask 254976
    %v191 = vsel %vm190, %v171, 0.0
    %192 = vadd.xlane.f32.xlu0 %v191
    %v193 = vpop.xlane.xlu0 %192
    %v201 = vlaneseq
    %v202 = vshrl.u32 %v201, 7
    %v203 = vsub.s32 0, %v202
    %v204 = vrot.slane %v174, %v203
    %v205 = vlaneseq
    %v206 = vshrl.u32 %v205, 7
    %v207 = vsub.s32 1, %v206
    %v208 = vrot.slane %v174, %v207
    %v209 = vlaneseq
    %v210 = vshrl.u32 %v209, 7
    %v211 = vsub.s32 2, %v210
    %v212 = vrot.slane %v174, %v211
    %v213 = vlaneseq
    %v214 = vshrl.u32 %v213, 7
    %v215 = vsub.s32 3, %v214
    %v216 = vrot.slane %v174, %v215
    %v217 = vlaneseq
    %v218 = vshrl.u32 %v217, 7
    %v219 = vsub.s32 4, %v218
    %v220 = vrot.slane %v174, %v219
    %v221 = vlaneseq
    %v222 = vshrl.u32 %v221, 7
    %v223 = vsub.s32 5, %v222
    %v224 = vrot.slane %v174, %v223
    %v225 = vlaneseq
    %v226 = vshrl.u32 %v225, 7
    %v227 = vsub.s32 6, %v226
    %v228 = vrot.slane %v174, %v227
    %v229 = vlaneseq
    %v230 = vshrl.u32 %v229, 7
    %v231 = vsub.s32 7, %v230
    %v232 = vrot.slane %v174, %v231
    %v233 = vlaneseq
    %v234 = vshrl.u32 %v233, 7
    %v235 = vsub.s32 0, %v234
    %v236 = vrot.slane %v177, %v235
    %v237 = vlaneseq
    %v238 = vshrl.u32 %v237, 7
    %v239 = vsub.s32 1, %v238
    %v240 = vrot.slane %v177, %v239
    %v241 = vlaneseq
    %v242 = vshrl.u32 %v241, 7
    %v243 = vsub.s32 2, %v242
    %v244 = vrot.slane %v177, %v243
    %v245 = vlaneseq
    %v246 = vshrl.u32 %v245, 7
    %v247 = vsub.s32 3, %v246
    %v248 = vrot.slane %v177, %v247
    %v249 = vlaneseq
    %v250 = vshrl.u32 %v249, 7
    %v251 = vsub.s32 4, %v250
    %v252 = vrot.slane %v177, %v251
    %v253 = vlaneseq
    %v254 = vshrl.u32 %v253, 7
    %v255 = vsub.s32 5, %v254
    %v256 = vrot.slane %v177, %v255
    %v257 = vlaneseq
    %v258 = vshrl.u32 %v257, 7
    %v259 = vsub.s32 6, %v258
    %v260 = vrot.slane %v177, %v259
    %v261 = vlaneseq
    %v262 = vshrl.u32 %v261, 7
    %v263 = vsub.s32 7, %v262
    %v264 = vrot.slane %v177, %v263
    %v265 = vlaneseq
    %v266 = vshrl.u32 %v265, 7
    %v267 = vsub.s32 0, %v266
    %v268 = vrot.slane %v180, %v267
    %v269 = vlaneseq
    %v270 = vshrl.u32 %v269, 7
    %v271 = vsub.s32 1, %v270
    %v272 = vrot.slane %v180, %v271
    %v273 = vlaneseq
    %v274 = vshrl.u32 %v273, 7
    %v275 = vsub.s32 2, %v274
    %v276 = vrot.slane %v180, %v275
    %v277 = vlaneseq
    %v278 = vshrl.u32 %v277, 7
    %v279 = vsub.s32 3, %v278
    %v280 = vrot.slane %v180, %v279
    %v281 = vlaneseq
    %v282 = vshrl.u32 %v281, 7
    %v283 = vsub.s32 4, %v282
    %v284 = vrot.slane %v180, %v283
    %v285 = vlaneseq
    %v286 = vshrl.u32 %v285, 7
    %v287 = vsub.s32 5, %v286
    %v288 = vrot.slane %v180, %v287
    %v289 = vlaneseq
    %v290 = vshrl.u32 %v289, 7
    %v291 = vsub.s32 6, %v290
    %v292 = vrot.slane %v180, %v291
    %v293 = vlaneseq
    %v294 = vshrl.u32 %v293, 7
    %v295 = vsub.s32 7, %v294
    %v296 = vrot.slane %v180, %v295
    %v297 = vlaneseq
    %v298 = vshrl.u32 %v297, 7
    %v299 = vsub.s32 0, %v298
    %v300 = vrot.slane %v183, %v299
    %v301 = vlaneseq
    %v302 = vshrl.u32 %v301, 7
    %v303 = vsub.s32 1, %v302
    %v304 = vrot.slane %v183, %v303
    %v305 = vlaneseq
    %v306 = vshrl.u32 %v305, 7
    %v307 = vsub.s32 2, %v306
    %v308 = vrot.slane %v183, %v307
    %v309 = vlaneseq
    %v310 = vshrl.u32 %v309, 7
    %v311 = vsub.s32 3, %v310
    %v312 = vrot.slane %v183, %v311
    %v313 = vlaneseq
    %v314 = vshrl.u32 %v313, 7
    %v315 = vsub.s32 4, %v314
    %v316 = vrot.slane %v183, %v315
    %v317 = vlaneseq
    %v318 = vshrl.u32 %v317, 7
    %v319 = vsub.s32 5, %v318
    %v320 = vrot.slane %v183, %v319
    %v321 = vlaneseq
    %v322 = vshrl.u32 %v321, 7
    %v323 = vsub.s32 6, %v322
    %v324 = vrot.slane %v183, %v323
    %v325 = vlaneseq
    %v326 = vshrl.u32 %v325, 7
    %v327 = vsub.s32 7, %v326
    %v328 = vrot.slane %v183, %v327
    %v329 = vlaneseq
    %v330 = vshrl.u32 %v329, 7
    %v331 = vsub.s32 0, %v330
    %v332 = vrot.slane %v186, %v331
    %v333 = vlaneseq
    %v334 = vshrl.u32 %v333, 7
    %v335 = vsub.s32 1, %v334
    %v336 = vrot.slane %v186, %v335
    %v337 = vlaneseq
    %v338 = vshrl.u32 %v337, 7
    %v339 = vsub.s32 2, %v338
    %v340 = vrot.slane %v186, %v339
    %v341 = vlaneseq
    %v342 = vshrl.u32 %v341, 7
    %v343 = vsub.s32 3, %v342
    %v344 = vrot.slane %v186, %v343
    %v345 = vlaneseq
    %v346 = vshrl.u32 %v345, 7
    %v347 = vsub.s32 4, %v346
    %v348 = vrot.slane %v186, %v347
    %v349 = vlaneseq
    %v350 = vshrl.u32 %v349, 7
    %v351 = vsub.s32 5, %v350
    %v352 = vrot.slane %v186, %v351
    %v353 = vlaneseq
    %v354 = vshrl.u32 %v353, 7
    %v355 = vsub.s32 6, %v354
    %v356 = vrot.slane %v186, %v355
    %v357 = vlaneseq
    %v358 = vshrl.u32 %v357, 7
    %v359 = vsub.s32 7, %v358
    %v360 = vrot.slane %v186, %v359
    %v361 = vlaneseq
    %v362 = vshrl.u32 %v361, 7
    %v363 = vsub.s32 0, %v362
    %v364 = vrot.slane %v189, %v363
    %v365 = vlaneseq
    %v366 = vshrl.u32 %v365, 7
    %v367 = vsub.s32 1, %v366
    %v368 = vrot.slane %v189, %v367
    %v369 = vlaneseq
    %v370 = vshrl.u32 %v369, 7
    %v371 = vsub.s32 2, %v370
    %v372 = vrot.slane %v189, %v371
    %v373 = vlaneseq
    %v374 = vshrl.u32 %v373, 7
    %v375 = vsub.s32 3, %v374
    %v376 = vrot.slane %v189, %v375
    %v377 = vlaneseq
    %v378 = vshrl.u32 %v377, 7
    %v379 = vsub.s32 4, %v378
    %v380 = vrot.slane %v189, %v379
    %v381 = vlaneseq
    %v382 = vshrl.u32 %v381, 7
    %v383 = vsub.s32 5, %v382
    %v384 = vrot.slane %v189, %v383
    %v385 = vlaneseq
    %v386 = vshrl.u32 %v385, 7
    %v387 = vsub.s32 6, %v386
    %v388 = vrot.slane %v189, %v387
    %v389 = vlaneseq
    %v390 = vshrl.u32 %v389, 7
    %v391 = vsub.s32 7, %v390
    %v392 = vrot.slane %v189, %v391
    %v393 = vlaneseq
    %v394 = vshrl.u32 %v393, 7
    %v395 = vsub.s32 0, %v394
    %v396 = vrot.slane %v193, %v395
    %v397 = vlaneseq
    %v398 = vshrl.u32 %v397, 7
    %v399 = vsub.s32 1, %v398
    %v400 = vrot.slane %v193, %v399
    %v451 = vcombine.low %v204, %v208
    %v452 = vcombine.low %v212, %v216
    %v454 = vunpack.c.l.s4 1966171168
    %v455 = vunpack.c.0.s8 %v454
    %v456 = vlaneseq
    %v457 = vshrl.u32 %v456, 7
    %v458 = vsub.s32 %v455, %v457
    %v459 = vrot.slane %v451, %v458
    %v461 = vunpack.c.l.s4 1966171168
    %v462 = vunpack.c.0.s8 %v461
    %v463 = vlaneseq
    %v464 = vshrl.u32 %v463, 7
    %v465 = vsub.s32 %v462, %v464
    %v466 = vrot.slane %v452, %v465
    %v468 = vunpack.c.l.s4 1966171168
    %v469 = vunpack.c.0.s8 %v468
    %v470 = vlaneseq
    %v471 = vshrl.u32 %v470, 7
    %v472 = vsub.s32 %v469, %v471
    %v473 = vrot.slane %v220, %v472
    %v474 = vcombine.low %v459, %v466
    %v476 = vunpack.c.l.s4 1966171168
    %v477 = vunpack.c.0.s8 %v476
    %v478 = vlaneseq
    %v479 = vshrl.u32 %v478, 7
    %v480 = vsub.s32 %v477, %v479
    %v481 = vrot.slane %v474, %v480
    %v483 = vunpack.c.l.s4 1966171168
    %v484 = vunpack.c.0.s8 %v483
    %v485 = vlaneseq
    %v486 = vshrl.u32 %v485, 7
    %v487 = vsub.s32 %v484, %v486
    %v488 = vrot.slane %v473, %v487
    %v489 = vcombine.low %v481, %v488
    %v490 = vcombine.low %v224, %v228
    %v491 = vcombine.low %v232, %v236
    %v493 = vunpack.c.l.s4 1966171168
    %v494 = vunpack.c.0.s8 %v493
    %v495 = vlaneseq
    %v496 = vshrl.u32 %v495, 7
    %v497 = vsub.s32 %v494, %v496
    %v498 = vrot.slane %v490, %v497
    %v500 = vunpack.c.l.s4 1966171168
    %v501 = vunpack.c.0.s8 %v500
    %v502 = vlaneseq
    %v503 = vshrl.u32 %v502, 7
    %v504 = vsub.s32 %v501, %v503
    %v505 = vrot.slane %v491, %v504
    %v507 = vunpack.c.l.s4 1966171168
    %v508 = vunpack.c.0.s8 %v507
    %v509 = vlaneseq
    %v510 = vshrl.u32 %v509, 7
    %v511 = vsub.s32 %v508, %v510
    %v512 = vrot.slane %v240, %v511
    %v513 = vcombine.low %v498, %v505
    %v515 = vunpack.c.l.s4 1966171168
    %v516 = vunpack.c.0.s8 %v515
    %v517 = vlaneseq
    %v518 = vshrl.u32 %v517, 7
    %v519 = vsub.s32 %v516, %v518
    %v520 = vrot.slane %v513, %v519
    %v522 = vunpack.c.l.s4 1966171168
    %v523 = vunpack.c.0.s8 %v522
    %v524 = vlaneseq
    %v525 = vshrl.u32 %v524, 7
    %v526 = vsub.s32 %v523, %v525
    %v527 = vrot.slane %v512, %v526
    %v528 = vcombine.low %v520, %v527
    %v529 = vcombine.low %v244, %v248
    %v530 = vcombine.low %v252, %v256
    %v532 = vunpack.c.l.s4 1966171168
    %v533 = vunpack.c.0.s8 %v532
    %v534 = vlaneseq
    %v535 = vshrl.u32 %v534, 7
    %v536 = vsub.s32 %v533, %v535
    %v537 = vrot.slane %v529, %v536
    %v539 = vunpack.c.l.s4 1966171168
    %v540 = vunpack.c.0.s8 %v539
    %v541 = vlaneseq
    %v542 = vshrl.u32 %v541, 7
    %v543 = vsub.s32 %v540, %v542
    %v544 = vrot.slane %v530, %v543
    %v546 = vunpack.c.l.s4 1966171168
    %v547 = vunpack.c.0.s8 %v546
    %v548 = vlaneseq
    %v549 = vshrl.u32 %v548, 7
    %v550 = vsub.s32 %v547, %v549
    %v551 = vrot.slane %v260, %v550
    %v552 = vcombine.low %v537, %v544
    %v554 = vunpack.c.l.s4 1966171168
    %v555 = vunpack.c.0.s8 %v554
    %v556 = vlaneseq
    %v557 = vshrl.u32 %v556, 7
    %v558 = vsub.s32 %v555, %v557
    %v559 = vrot.slane %v552, %v558
    %v561 = vunpack.c.l.s4 1966171168
    %v562 = vunpack.c.0.s8 %v561
    %v563 = vlaneseq
    %v564 = vshrl.u32 %v563, 7
    %v565 = vsub.s32 %v562, %v564
    %v566 = vrot.slane %v551, %v565
    %v567 = vcombine.low %v559, %v566
    %v568 = vcombine.low %v264, %v268
    %v569 = vcombine.low %v272, %v276
    %v571 = vunpack.c.l.s4 1966171168
    %v572 = vunpack.c.0.s8 %v571
    %v573 = vlaneseq
    %v574 = vshrl.u32 %v573, 7
    %v575 = vsub.s32 %v572, %v574
    %v576 = vrot.slane %v568, %v575
    %v578 = vunpack.c.l.s4 1966171168
    %v579 = vunpack.c.0.s8 %v578
    %v580 = vlaneseq
    %v581 = vshrl.u32 %v580, 7
    %v582 = vsub.s32 %v579, %v581
    %v583 = vrot.slane %v569, %v582
    %v585 = vunpack.c.l.s4 1966171168
    %v586 = vunpack.c.0.s8 %v585
    %v587 = vlaneseq
    %v588 = vshrl.u32 %v587, 7
    %v589 = vsub.s32 %v586, %v588
    %v590 = vrot.slane %v280, %v589
    %v591 = vcombine.low %v576, %v583
    %v593 = vunpack.c.l.s4 1966171168
    %v594 = vunpack.c.0.s8 %v593
    %v595 = vlaneseq
    %v596 = vshrl.u32 %v595, 7
    %v597 = vsub.s32 %v594, %v596
    %v598 = vrot.slane %v591, %v597
    %v600 = vunpack.c.l.s4 1966171168
    %v601 = vunpack.c.0.s8 %v600
    %v602 = vlaneseq
    %v603 = vshrl.u32 %v602, 7
    %v604 = vsub.s32 %v601, %v603
    %v605 = vrot.slane %v590, %v604
    %v606 = vcombine.low %v598, %v605
    %v607 = vcombine.low %v284, %v288
    %v608 = vcombine.low %v292, %v296
    %v610 = vunpack.c.l.s4 1966171168
    %v611 = vunpack.c.0.s8 %v610
    %v612 = vlaneseq
    %v613 = vshrl.u32 %v612, 7
    %v614 = vsub.s32 %v611, %v613
    %v615 = vrot.slane %v607, %v614
    %v617 = vunpack.c.l.s4 1966171168
    %v618 = vunpack.c.0.s8 %v617
    %v619 = vlaneseq
    %v620 = vshrl.u32 %v619, 7
    %v621 = vsub.s32 %v618, %v620
    %v622 = vrot.slane %v608, %v621
    %v624 = vunpack.c.l.s4 1966171168
    %v625 = vunpack.c.0.s8 %v624
    %v626 = vlaneseq
    %v627 = vshrl.u32 %v626, 7
    %v628 = vsub.s32 %v625, %v627
    %v629 = vrot.slane %v300, %v628
    %v630 = vcombine.low %v615, %v622
    %v632 = vunpack.c.l.s4 1966171168
    %v633 = vunpack.c.0.s8 %v632
    %v634 = vlaneseq
    %v635 = vshrl.u32 %v634, 7
    %v636 = vsub.s32 %v633, %v635
    %v637 = vrot.slane %v630, %v636
    %v639 = vunpack.c.l.s4 1966171168
    %v640 = vunpack.c.0.s8 %v639
    %v641 = vlaneseq
    %v642 = vshrl.u32 %v641, 7
    %v643 = vsub.s32 %v640, %v642
    %v644 = vrot.slane %v629, %v643
    %v645 = vcombine.low %v637, %v644
    %v646 = vcombine.low %v304, %v308
    %v647 = vcombine.low %v312, %v316
    %v649 = vunpack.c.l.s4 1966171168
    %v650 = vunpack.c.0.s8 %v649
    %v651 = vlaneseq
    %v652 = vshrl.u32 %v651, 7
    %v653 = vsub.s32 %v650, %v652
    %v654 = vrot.slane %v646, %v653
    %v656 = vunpack.c.l.s4 1966171168
    %v657 = vunpack.c.0.s8 %v656
    %v658 = vlaneseq
    %v659 = vshrl.u32 %v658, 7
    %v660 = vsub.s32 %v657, %v659
    %v661 = vrot.slane %v647, %v660
    %v663 = vunpack.c.l.s4 1966171168
    %v664 = vunpack.c.0.s8 %v663
    %v665 = vlaneseq
    %v666 = vshrl.u32 %v665, 7
    %v667 = vsub.s32 %v664, %v666
    %v668 = vrot.slane %v320, %v667
    %v669 = vcombine.low %v654, %v661
    %v671 = vunpack.c.l.s4 1966171168
    %v672 = vunpack.c.0.s8 %v671
    %v673 = vlaneseq
    %v674 = vshrl.u32 %v673, 7
    %v675 = vsub.s32 %v672, %v674
    %v676 = vrot.slane %v669, %v675
    %v678 = vunpack.c.l.s4 1966171168
    %v679 = vunpack.c.0.s8 %v678
    %v680 = vlaneseq
    %v681 = vshrl.u32 %v680, 7
    %v682 = vsub.s32 %v679, %v681
    %v683 = vrot.slane %v668, %v682
    %v684 = vcombine.low %v676, %v683
    %v685 = vcombine.low %v324, %v328
    %v686 = vcombine.low %v332, %v336
    %v688 = vunpack.c.l.s4 1966171168
    %v689 = vunpack.c.0.s8 %v688
    %v690 = vlaneseq
    %v691 = vshrl.u32 %v690, 7
    %v692 = vsub.s32 %v689, %v691
    %v693 = vrot.slane %v685, %v692
    %v695 = vunpack.c.l.s4 1966171168
    %v696 = vunpack.c.0.s8 %v695
    %v697 = vlaneseq
    %v698 = vshrl.u32 %v697, 7
    %v699 = vsub.s32 %v696, %v698
    %v700 = vrot.slane %v686, %v699
    %v702 = vunpack.c.l.s4 1966171168
    %v703 = vunpack.c.0.s8 %v702
    %v704 = vlaneseq
    %v705 = vshrl.u32 %v704, 7
    %v706 = vsub.s32 %v703, %v705
    %v707 = vrot.slane %v340, %v706
    %v708 = vcombine.low %v693, %v700
    %v710 = vunpack.c.l.s4 1966171168
    %v711 = vunpack.c.0.s8 %v710
    %v712 = vlaneseq
    %v713 = vshrl.u32 %v712, 7
    %v714 = vsub.s32 %v711, %v713
    %v715 = vrot.slane %v708, %v714
    %v717 = vunpack.c.l.s4 1966171168
    %v718 = vunpack.c.0.s8 %v717
    %v719 = vlaneseq
    %v720 = vshrl.u32 %v719, 7
    %v721 = vsub.s32 %v718, %v720
    %v722 = vrot.slane %v707, %v721
    %v723 = vcombine.low %v715, %v722
    %v724 = vcombine.low %v344, %v348
    %v725 = vcombine.low %v352, %v356
    %v727 = vunpack.c.l.s4 1966171168
    %v728 = vunpack.c.0.s8 %v727
    %v729 = vlaneseq
    %v730 = vshrl.u32 %v729, 7
    %v731 = vsub.s32 %v728, %v730
    %v732 = vrot.slane %v724, %v731
    %v734 = vunpack.c.l.s4 1966171168
    %v735 = vunpack.c.0.s8 %v734
    %v736 = vlaneseq
    %v737 = vshrl.u32 %v736, 7
    %v738 = vsub.s32 %v735, %v737
    %v739 = vrot.slane %v725, %v738
    %v741 = vunpack.c.l.s4 1966171168
    %v742 = vunpack.c.0.s8 %v741
    %v743 = vlaneseq
    %v744 = vshrl.u32 %v743, 7
    %v745 = vsub.s32 %v742, %v744
    %v746 = vrot.slane %v360, %v745
    %v747 = vcombine.low %v732, %v739
    %v749 = vunpack.c.l.s4 1966171168
    %v750 = vunpack.c.0.s8 %v749
    %v751 = vlaneseq
    %v752 = vshrl.u32 %v751, 7
    %v753 = vsub.s32 %v750, %v752
    %v754 = vrot.slane %v747, %v753
    %v756 = vunpack.c.l.s4 1966171168
    %v757 = vunpack.c.0.s8 %v756
    %v758 = vlaneseq
    %v759 = vshrl.u32 %v758, 7
    %v760 = vsub.s32 %v757, %v759
    %v761 = vrot.slane %v746, %v760
    %v762 = vcombine.low %v754, %v761
    %v763 = vcombine.low %v364, %v368
    %v764 = vcombine.low %v372, %v376
    %v766 = vunpack.c.l.s4 1966171168
    %v767 = vunpack.c.0.s8 %v766
    %v768 = vlaneseq
    %v769 = vshrl.u32 %v768, 7
    %v770 = vsub.s32 %v767, %v769
    %v771 = vrot.slane %v763, %v770
    %v773 = vunpack.c.l.s4 1966171168
    %v774 = vunpack.c.0.s8 %v773
    %v775 = vlaneseq
    %v776 = vshrl.u32 %v775, 7
    %v777 = vsub.s32 %v774, %v776
    %v778 = vrot.slane %v764, %v777
    %v780 = vunpack.c.l.s4 1966171168
    %v781 = vunpack.c.0.s8 %v780
    %v782 = vlaneseq
    %v783 = vshrl.u32 %v782, 7
    %v784 = vsub.s32 %v781, %v783
    %v785 = vrot.slane %v380, %v784
    %v786 = vcombine.low %v771, %v778
    %v788 = vunpack.c.l.s4 1966171168
    %v789 = vunpack.c.0.s8 %v788
    %v790 = vlaneseq
    %v791 = vshrl.u32 %v790, 7
    %v792 = vsub.s32 %v789, %v791
    %v793 = vrot.slane %v786, %v792
    %v795 = vunpack.c.l.s4 1966171168
    %v796 = vunpack.c.0.s8 %v795
    %v797 = vlaneseq
    %v798 = vshrl.u32 %v797, 7
    %v799 = vsub.s32 %v796, %v798
    %v800 = vrot.slane %v785, %v799
    %v801 = vcombine.low %v793, %v800
    %v802 = vcombine.low %v384, %v388
    %v803 = vcombine.low %v392, %v396
    %v805 = vunpack.c.l.s4 1966171168
    %v806 = vunpack.c.0.s8 %v805
    %v807 = vlaneseq
    %v808 = vshrl.u32 %v807, 7
    %v809 = vsub.s32 %v806, %v808
    %v810 = vrot.slane %v802, %v809
    %v812 = vunpack.c.l.s4 1966171168
    %v813 = vunpack.c.0.s8 %v812
    %v814 = vlaneseq
    %v815 = vshrl.u32 %v814, 7
    %v816 = vsub.s32 %v813, %v815
    %v817 = vrot.slane %v803, %v816
    %v819 = vunpack.c.l.s4 1966171168
    %v820 = vunpack.c.0.s8 %v819
    %v821 = vlaneseq
    %v822 = vshrl.u32 %v821, 7
    %v823 = vsub.s32 %v820, %v822
    %v824 = vrot.slane %v400, %v823
    %v825 = vcombine.low %v810, %v817
    %v827 = vunpack.c.l.s4 1966171168
    %v828 = vunpack.c.0.s8 %v827
    %v829 = vlaneseq
    %v830 = vshrl.u32 %v829, 7
    %v831 = vsub.s32 %v828, %v830
    %v832 = vrot.slane %v825, %v831
    %v834 = vunpack.c.l.s4 1966171168
    %v835 = vunpack.c.0.s8 %v834
    %v836 = vlaneseq
    %v837 = vshrl.u32 %v836, 7
    %v838 = vsub.s32 %v835, %v837
    %v839 = vrot.slane %v824, %v838
    %v840 = vcombine.low %v832, %v839
    %841 = vset.pattern.permute.xlu0 0
    %842 = vperm.xlu0 %841, %v489
    %v843 = vpop.permute.xlu0 %842
    %844 = vset.pattern.permute.xlu0 0
    %845 = vperm.xlu0 %844, %v528
    %v846 = vpop.permute.xlu0 %845
    %847 = vset.pattern.permute.xlu0 0
    %848 = vperm.xlu0 %847, %v567
    %v849 = vpop.permute.xlu0 %848
    %850 = vset.pattern.permute.xlu0 0
    %851 = vperm.xlu0 %850, %v606
    %v852 = vpop.permute.xlu0 %851
    %853 = vset.pattern.permute.xlu0 0
    %854 = vperm.xlu0 %853, %v645
    %v855 = vpop.permute.xlu0 %854
    %856 = vset.pattern.permute.xlu0 0
    %857 = vperm.xlu0 %856, %v684
    %v858 = vpop.permute.xlu0 %857
    %859 = vset.pattern.permute.xlu0 0
    %860 = vperm.xlu0 %859, %v723
    %v861 = vpop.permute.xlu0 %860
    %862 = vset.pattern.permute.xlu0 0
    %863 = vperm.xlu0 %862, %v762
    %v864 = vpop.permute.xlu0 %863
    %865 = vset.pattern.permute.xlu0 0
    %866 = vperm.xlu0 %865, %v801
    %v867 = vpop.permute.xlu0 %866
    %868 = vset.pattern.permute.xlu0 0
    %869 = vperm.xlu0 %868, %v840
    %v870 = vpop.permute.xlu0 %869
    %v871 = vlaneseq
    %v872 = vand.u32 %v871, 127
    %v873 = vlaneseq
    %v874 = vshrl.u32 %v873, 7
    %v875 = vsub.s32 %v872, %v874
    %v876 = vrot.slane %v843, %v875
    %v877 = vlaneseq
    %v878 = vshrl.u32 %v877, 7
    %v879 = vsub.s32 %v872, %v878
    %v880 = vrot.slane %v846, %v879
    %v881 = vlaneseq
    %v882 = vshrl.u32 %v881, 7
    %v883 = vsub.s32 %v872, %v882
    %v884 = vrot.slane %v849, %v883
    %v885 = vlaneseq
    %v886 = vshrl.u32 %v885, 7
    %v887 = vsub.s32 %v872, %v886
    %v888 = vrot.slane %v852, %v887
    %v889 = vlaneseq
    %v890 = vshrl.u32 %v889, 7
    %v891 = vsub.s32 %v872, %v890
    %v892 = vrot.slane %v855, %v891
    %v893 = vlaneseq
    %v894 = vshrl.u32 %v893, 7
    %v895 = vsub.s32 %v872, %v894
    %v896 = vrot.slane %v858, %v895
    %v897 = vlaneseq
    %v898 = vshrl.u32 %v897, 7
    %v899 = vsub.s32 %v872, %v898
    %v900 = vrot.slane %v861, %v899
    %v901 = vlaneseq
    %v902 = vshrl.u32 %v901, 7
    %v903 = vsub.s32 %v872, %v902
    %v904 = vrot.slane %v864, %v903
    %v905 = vlaneseq
    %v906 = vshrl.u32 %v905, 7
    %v907 = vsub.s32 %v872, %v906
    %v908 = vrot.slane %v867, %v907
    %v909 = vlaneseq
    %v910 = vshrl.u32 %v909, 7
    %v911 = vsub.s32 %v872, %v910
    %v912 = vrot.slane %v870, %v911
    %vm913 = vcmask 1041409
    %v914 = vsel %vm913, %v880, %v876
    %vm915 = vcmask 1042434
    %v916 = vsel %vm915, %v884, %v914
    %vm917 = vcmask 1043459
    %v918 = vsel %vm917, %v888, %v916
    %vm919 = vcmask 1044484
    %v920 = vsel %vm919, %v892, %v918
    %vm921 = vcmask 1045509
    %v922 = vsel %vm921, %v896, %v920
    %vm923 = vcmask 1046534
    %v924 = vsel %vm923, %v900, %v922
    %vm925 = vcmask 1047559
    %v926 = vsel %vm925, %v904, %v924
    %v927 = vsel %vm913, %v912, %v908
    %vm930 = vcmask 39936
    %v931 = vsel %vm930, %v926, -inf
    %932 = vmax.xlane.f32.xlu0 %v931
    %v933 = vpop.xlane.xlu0 %932
    %vm934 = vcmask 33792
    %v935 = vsel %vm934, %v927, -inf
    %936 = vmax.xlane.f32.xlu0 %v935
    %v937 = vpop.xlane.xlu0 %936
    %v940 = vlaneseq
    %v941 = vshrl.u32 %v940, 7
    %v942 = vsub.s32 0, %v941
    %v943 = vrot.slane %v933, %v942
    %v944 = vlaneseq
    %v945 = vshrl.u32 %v944, 7
    %v946 = vsub.s32 1, %v945
    %v947 = vrot.slane %v933, %v946
    %v948 = vlaneseq
    %v949 = vshrl.u32 %v948, 7
    %v950 = vsub.s32 2, %v949
    %v951 = vrot.slane %v933, %v950
    %v952 = vlaneseq
    %v953 = vshrl.u32 %v952, 7
    %v954 = vsub.s32 3, %v953
    %v955 = vrot.slane %v933, %v954
    %v956 = vlaneseq
    %v957 = vshrl.u32 %v956, 7
    %v958 = vsub.s32 4, %v957
    %v959 = vrot.slane %v933, %v958
    %v960 = vlaneseq
    %v961 = vshrl.u32 %v960, 7
    %v962 = vsub.s32 5, %v961
    %v963 = vrot.slane %v933, %v962
    %v964 = vlaneseq
    %v965 = vshrl.u32 %v964, 7
    %v966 = vsub.s32 6, %v965
    %v967 = vrot.slane %v933, %v966
    %v968 = vlaneseq
    %v969 = vshrl.u32 %v968, 7
    %v970 = vsub.s32 7, %v969
    %v971 = vrot.slane %v933, %v970
    %v972 = vlaneseq
    %v973 = vshrl.u32 %v972, 7
    %v974 = vsub.s32 0, %v973
    %v975 = vrot.slane %v937, %v974
    %v976 = vlaneseq
    %v977 = vshrl.u32 %v976, 7
    %v978 = vsub.s32 1, %v977
    %v979 = vrot.slane %v937, %v978
    %v980 = vcombine.low %v943, %v947
    %v981 = vcombine.low %v951, %v955
    %v982 = vcombine.low %v959, %v963
    %v983 = vcombine.low %v967, %v971
    %v985 = vunpack.c.l.s4 1966171168
    %v986 = vunpack.c.0.s8 %v985
    %v987 = vlaneseq
    %v988 = vshrl.u32 %v987, 7
    %v989 = vsub.s32 %v986, %v988
    %v990 = vrot.slane %v980, %v989
    %v992 = vunpack.c.l.s4 1966171168
    %v993 = vunpack.c.0.s8 %v992
    %v994 = vlaneseq
    %v995 = vshrl.u32 %v994, 7
    %v996 = vsub.s32 %v993, %v995
    %v997 = vrot.slane %v981, %v996
    %v999 = vunpack.c.l.s4 1966171168
    %v1000 = vunpack.c.0.s8 %v999
    %v1001 = vlaneseq
    %v1002 = vshrl.u32 %v1001, 7
    %v1003 = vsub.s32 %v1000, %v1002
    %v1004 = vrot.slane %v982, %v1003
    %v1006 = vunpack.c.l.s4 1966171168
    %v1007 = vunpack.c.0.s8 %v1006
    %v1008 = vlaneseq
    %v1009 = vshrl.u32 %v1008, 7
    %v1010 = vsub.s32 %v1007, %v1009
    %v1011 = vrot.slane %v983, %v1010
    %v1012 = vcombine.low %v990, %v997
    %v1013 = vcombine.low %v1004, %v1011
    %v1015 = vunpack.c.l.s4 1966171168
    %v1016 = vunpack.c.0.s8 %v1015
    %v1017 = vlaneseq
    %v1018 = vshrl.u32 %v1017, 7
    %v1019 = vsub.s32 %v1016, %v1018
    %v1020 = vrot.slane %v1012, %v1019
    %v1022 = vunpack.c.l.s4 1966171168
    %v1023 = vunpack.c.0.s8 %v1022
    %v1024 = vlaneseq
    %v1025 = vshrl.u32 %v1024, 7
    %v1026 = vsub.s32 %v1023, %v1025
    %v1027 = vrot.slane %v1013, %v1026
    %v1028 = vcombine.low %v1020, %v1027
    %v1029 = vcombine.low %v975, %v979
    %v1031 = vunpack.c.l.s4 1966171168
    %v1032 = vunpack.c.0.s8 %v1031
    %v1033 = vlaneseq
    %v1034 = vshrl.u32 %v1033, 7
    %v1035 = vsub.s32 %v1032, %v1034
    %v1036 = vrot.slane %v1029, %v1035
    %v1038 = vunpack.c.l.s4 1966171168
    %v1039 = vunpack.c.0.s8 %v1038
    %v1040 = vlaneseq
    %v1041 = vshrl.u32 %v1040, 7
    %v1042 = vsub.s32 %v1039, %v1041
    %v1043 = vrot.slane %v1036, %v1042
    %v1044 = vlaneseq
    %v1045 = vshrl.u32 %v1044, 7
    %v1046 = vsub.s32 0, %v1045
    %v1047 = vrot.slane %v1028, %v1046
    %1049 = vbcast.lane.b32.xlu0 %v1047, 256
    %v1050 = vpop.permute.xlu0 %1049
    %v1051 = vlaneseq
    %v1052 = vshrl.u32 %v1051, 7
    %v1053 = vsub.s32 1, %v1052
    %v1054 = vrot.slane %v1028, %v1053
    %1056 = vbcast.lane.b32.xlu0 %v1054, 256
    %v1057 = vpop.permute.xlu0 %1056
    %v1058 = vlaneseq
    %v1059 = vshrl.u32 %v1058, 7
    %v1060 = vsub.s32 2, %v1059
    %v1061 = vrot.slane %v1028, %v1060
    %1063 = vbcast.lane.b32.xlu0 %v1061, 256
    %v1064 = vpop.permute.xlu0 %1063
    %v1065 = vlaneseq
    %v1066 = vshrl.u32 %v1065, 7
    %v1067 = vsub.s32 3, %v1066
    %v1068 = vrot.slane %v1028, %v1067
    %1070 = vbcast.lane.b32.xlu0 %v1068, 256
    %v1071 = vpop.permute.xlu0 %1070
    %v1072 = vlaneseq
    %v1073 = vshrl.u32 %v1072, 7
    %v1074 = vsub.s32 4, %v1073
    %v1075 = vrot.slane %v1028, %v1074
    %1077 = vbcast.lane.b32.xlu0 %v1075, 256
    %v1078 = vpop.permute.xlu0 %1077
    %v1079 = vlaneseq
    %v1080 = vshrl.u32 %v1079, 7
    %v1081 = vsub.s32 5, %v1080
    %v1082 = vrot.slane %v1028, %v1081
    %1084 = vbcast.lane.b32.xlu0 %v1082, 256
    %v1085 = vpop.permute.xlu0 %1084
    %v1086 = vlaneseq
    %v1087 = vshrl.u32 %v1086, 7
    %v1088 = vsub.s32 6, %v1087
    %v1089 = vrot.slane %v1028, %v1088
    %1091 = vbcast.lane.b32.xlu0 %v1089, 256
    %v1092 = vpop.permute.xlu0 %1091
    %v1093 = vlaneseq
    %v1094 = vshrl.u32 %v1093, 7
    %v1095 = vsub.s32 7, %v1094
    %v1096 = vrot.slane %v1028, %v1095
    %1098 = vbcast.lane.b32.xlu0 %v1096, 256
    %v1099 = vpop.permute.xlu0 %1098
    %v1100 = vlaneseq
    %v1101 = vshrl.u32 %v1100, 7
    %v1102 = vsub.s32 0, %v1101
    %v1103 = vrot.slane %v1043, %v1102
    %1105 = vbcast.lane.b32.xlu0 %v1103, 256
    %v1106 = vpop.permute.xlu0 %1105
    %v1107 = vlaneseq
    %v1108 = vshrl.u32 %v1107, 7
    %v1109 = vsub.s32 1, %v1108
    %v1110 = vrot.slane %v1043, %v1109
    %1112 = vbcast.lane.b32.xlu0 %v1110, 256
    %v1113 = vpop.permute.xlu0 %1112
    %v1114 = vcombine.high %v1050, %v1050
    %v1116 = vunpack.c.l.s4 1966171168
    %v1117 = vunpack.c.0.s8 %v1116
    %v1118 = vlaneseq
    %v1119 = vshrl.u32 %v1118, 7
    %v1120 = vsub.s32 %v1117, %v1119
    %v1121 = vrot.slane %v1050, %v1120
    %v1123 = vunpack.c.l.s4 1966171168
    %v1124 = vunpack.c.0.s8 %v1123
    %v1125 = vlaneseq
    %v1126 = vshrl.u32 %v1125, 7
    %v1127 = vsub.s32 %v1124, %v1126
    %v1128 = vrot.slane %v1114, %v1127
    %v1129 = vcombine.high %v1121, %v1121
    %v1131 = vunpack.c.l.s4 1966171168
    %v1132 = vunpack.c.0.s8 %v1131
    %v1133 = vlaneseq
    %v1134 = vshrl.u32 %v1133, 7
    %v1135 = vsub.s32 %v1132, %v1134
    %v1136 = vrot.slane %v1121, %v1135
    %v1138 = vunpack.c.l.s4 1966171168
    %v1139 = vunpack.c.0.s8 %v1138
    %v1140 = vlaneseq
    %v1141 = vshrl.u32 %v1140, 7
    %v1142 = vsub.s32 %v1139, %v1141
    %v1143 = vrot.slane %v1128, %v1142
    %v1145 = vunpack.c.l.s4 1966171168
    %v1146 = vunpack.c.0.s8 %v1145
    %v1147 = vlaneseq
    %v1148 = vshrl.u32 %v1147, 7
    %v1149 = vsub.s32 %v1146, %v1148
    %v1150 = vrot.slane %v1129, %v1149
    %v1151 = vcombine.high %v1136, %v1136
    %v1152 = vcombine.high %v1150, %v1150
    %v1153 = vcombine.high %v1057, %v1057
    %v1155 = vunpack.c.l.s4 1966171168
    %v1156 = vunpack.c.0.s8 %v1155
    %v1157 = vlaneseq
    %v1158 = vshrl.u32 %v1157, 7
    %v1159 = vsub.s32 %v1156, %v1158
    %v1160 = vrot.slane %v1057, %v1159
    %v1162 = vunpack.c.l.s4 1966171168
    %v1163 = vunpack.c.0.s8 %v1162
    %v1164 = vlaneseq
    %v1165 = vshrl.u32 %v1164, 7
    %v1166 = vsub.s32 %v1163, %v1165
    %v1167 = vrot.slane %v1153, %v1166
    %v1168 = vcombine.high %v1160, %v1160
    %v1170 = vunpack.c.l.s4 1966171168
    %v1171 = vunpack.c.0.s8 %v1170
    %v1172 = vlaneseq
    %v1173 = vshrl.u32 %v1172, 7
    %v1174 = vsub.s32 %v1171, %v1173
    %v1175 = vrot.slane %v1160, %v1174
    %v1177 = vunpack.c.l.s4 1966171168
    %v1178 = vunpack.c.0.s8 %v1177
    %v1179 = vlaneseq
    %v1180 = vshrl.u32 %v1179, 7
    %v1181 = vsub.s32 %v1178, %v1180
    %v1182 = vrot.slane %v1167, %v1181
    %v1184 = vunpack.c.l.s4 1966171168
    %v1185 = vunpack.c.0.s8 %v1184
    %v1186 = vlaneseq
    %v1187 = vshrl.u32 %v1186, 7
    %v1188 = vsub.s32 %v1185, %v1187
    %v1189 = vrot.slane %v1168, %v1188
    %v1190 = vcombine.high %v1175, %v1175
    %v1191 = vcombine.high %v1189, %v1189
    %v1192 = vcombine.high %v1064, %v1064
    %v1194 = vunpack.c.l.s4 1966171168
    %v1195 = vunpack.c.0.s8 %v1194
    %v1196 = vlaneseq
    %v1197 = vshrl.u32 %v1196, 7
    %v1198 = vsub.s32 %v1195, %v1197
    %v1199 = vrot.slane %v1064, %v1198
    %v1201 = vunpack.c.l.s4 1966171168
    %v1202 = vunpack.c.0.s8 %v1201
    %v1203 = vlaneseq
    %v1204 = vshrl.u32 %v1203, 7
    %v1205 = vsub.s32 %v1202, %v1204
    %v1206 = vrot.slane %v1192, %v1205
    %v1207 = vcombine.high %v1199, %v1199
    %v1209 = vunpack.c.l.s4 1966171168
    %v1210 = vunpack.c.0.s8 %v1209
    %v1211 = vlaneseq
    %v1212 = vshrl.u32 %v1211, 7
    %v1213 = vsub.s32 %v1210, %v1212
    %v1214 = vrot.slane %v1199, %v1213
    %v1216 = vunpack.c.l.s4 1966171168
    %v1217 = vunpack.c.0.s8 %v1216
    %v1218 = vlaneseq
    %v1219 = vshrl.u32 %v1218, 7
    %v1220 = vsub.s32 %v1217, %v1219
    %v1221 = vrot.slane %v1206, %v1220
    %v1223 = vunpack.c.l.s4 1966171168
    %v1224 = vunpack.c.0.s8 %v1223
    %v1225 = vlaneseq
    %v1226 = vshrl.u32 %v1225, 7
    %v1227 = vsub.s32 %v1224, %v1226
    %v1228 = vrot.slane %v1207, %v1227
    %v1229 = vcombine.high %v1214, %v1214
    %v1230 = vcombine.high %v1228, %v1228
    %v1231 = vcombine.high %v1071, %v1071
    %v1233 = vunpack.c.l.s4 1966171168
    %v1234 = vunpack.c.0.s8 %v1233
    %v1235 = vlaneseq
    %v1236 = vshrl.u32 %v1235, 7
    %v1237 = vsub.s32 %v1234, %v1236
    %v1238 = vrot.slane %v1071, %v1237
    %v1240 = vunpack.c.l.s4 1966171168
    %v1241 = vunpack.c.0.s8 %v1240
    %v1242 = vlaneseq
    %v1243 = vshrl.u32 %v1242, 7
    %v1244 = vsub.s32 %v1241, %v1243
    %v1245 = vrot.slane %v1231, %v1244
    %v1246 = vcombine.high %v1238, %v1238
    %v1248 = vunpack.c.l.s4 1966171168
    %v1249 = vunpack.c.0.s8 %v1248
    %v1250 = vlaneseq
    %v1251 = vshrl.u32 %v1250, 7
    %v1252 = vsub.s32 %v1249, %v1251
    %v1253 = vrot.slane %v1238, %v1252
    %v1255 = vunpack.c.l.s4 1966171168
    %v1256 = vunpack.c.0.s8 %v1255
    %v1257 = vlaneseq
    %v1258 = vshrl.u32 %v1257, 7
    %v1259 = vsub.s32 %v1256, %v1258
    %v1260 = vrot.slane %v1245, %v1259
    %v1262 = vunpack.c.l.s4 1966171168
    %v1263 = vunpack.c.0.s8 %v1262
    %v1264 = vlaneseq
    %v1265 = vshrl.u32 %v1264, 7
    %v1266 = vsub.s32 %v1263, %v1265
    %v1267 = vrot.slane %v1246, %v1266
    %v1268 = vcombine.high %v1253, %v1253
    %v1269 = vcombine.high %v1267, %v1267
    %v1270 = vcombine.high %v1078, %v1078
    %v1272 = vunpack.c.l.s4 1966171168
    %v1273 = vunpack.c.0.s8 %v1272
    %v1274 = vlaneseq
    %v1275 = vshrl.u32 %v1274, 7
    %v1276 = vsub.s32 %v1273, %v1275
    %v1277 = vrot.slane %v1078, %v1276
    %v1279 = vunpack.c.l.s4 1966171168
    %v1280 = vunpack.c.0.s8 %v1279
    %v1281 = vlaneseq
    %v1282 = vshrl.u32 %v1281, 7
    %v1283 = vsub.s32 %v1280, %v1282
    %v1284 = vrot.slane %v1270, %v1283
    %v1285 = vcombine.high %v1277, %v1277
    %v1287 = vunpack.c.l.s4 1966171168
    %v1288 = vunpack.c.0.s8 %v1287
    %v1289 = vlaneseq
    %v1290 = vshrl.u32 %v1289, 7
    %v1291 = vsub.s32 %v1288, %v1290
    %v1292 = vrot.slane %v1277, %v1291
    %v1294 = vunpack.c.l.s4 1966171168
    %v1295 = vunpack.c.0.s8 %v1294
    %v1296 = vlaneseq
    %v1297 = vshrl.u32 %v1296, 7
    %v1298 = vsub.s32 %v1295, %v1297
    %v1299 = vrot.slane %v1284, %v1298
    %v1301 = vunpack.c.l.s4 1966171168
    %v1302 = vunpack.c.0.s8 %v1301
    %v1303 = vlaneseq
    %v1304 = vshrl.u32 %v1303, 7
    %v1305 = vsub.s32 %v1302, %v1304
    %v1306 = vrot.slane %v1285, %v1305
    %v1307 = vcombine.high %v1292, %v1292
    %v1308 = vcombine.high %v1306, %v1306
    %v1309 = vcombine.high %v1085, %v1085
    %v1311 = vunpack.c.l.s4 1966171168
    %v1312 = vunpack.c.0.s8 %v1311
    %v1313 = vlaneseq
    %v1314 = vshrl.u32 %v1313, 7
    %v1315 = vsub.s32 %v1312, %v1314
    %v1316 = vrot.slane %v1085, %v1315
    %v1318 = vunpack.c.l.s4 1966171168
    %v1319 = vunpack.c.0.s8 %v1318
    %v1320 = vlaneseq
    %v1321 = vshrl.u32 %v1320, 7
    %v1322 = vsub.s32 %v1319, %v1321
    %v1323 = vrot.slane %v1309, %v1322
    %v1324 = vcombine.high %v1316, %v1316
    %v1326 = vunpack.c.l.s4 1966171168
    %v1327 = vunpack.c.0.s8 %v1326
    %v1328 = vlaneseq
    %v1329 = vshrl.u32 %v1328, 7
    %v1330 = vsub.s32 %v1327, %v1329
    %v1331 = vrot.slane %v1316, %v1330
    %v1333 = vunpack.c.l.s4 1966171168
    %v1334 = vunpack.c.0.s8 %v1333
    %v1335 = vlaneseq
    %v1336 = vshrl.u32 %v1335, 7
    %v1337 = vsub.s32 %v1334, %v1336
    %v1338 = vrot.slane %v1323, %v1337
    %v1340 = vunpack.c.l.s4 1966171168
    %v1341 = vunpack.c.0.s8 %v1340
    %v1342 = vlaneseq
    %v1343 = vshrl.u32 %v1342, 7
    %v1344 = vsub.s32 %v1341, %v1343
    %v1345 = vrot.slane %v1324, %v1344
    %v1346 = vcombine.high %v1331, %v1331
    %v1347 = vcombine.high %v1345, %v1345
    %v1348 = vcombine.high %v1092, %v1092
    %v1350 = vunpack.c.l.s4 1966171168
    %v1351 = vunpack.c.0.s8 %v1350
    %v1352 = vlaneseq
    %v1353 = vshrl.u32 %v1352, 7
    %v1354 = vsub.s32 %v1351, %v1353
    %v1355 = vrot.slane %v1092, %v1354
    %v1357 = vunpack.c.l.s4 1966171168
    %v1358 = vunpack.c.0.s8 %v1357
    %v1359 = vlaneseq
    %v1360 = vshrl.u32 %v1359, 7
    %v1361 = vsub.s32 %v1358, %v1360
    %v1362 = vrot.slane %v1348, %v1361
    %v1363 = vcombine.high %v1355, %v1355
    %v1365 = vunpack.c.l.s4 1966171168
    %v1366 = vunpack.c.0.s8 %v1365
    %v1367 = vlaneseq
    %v1368 = vshrl.u32 %v1367, 7
    %v1369 = vsub.s32 %v1366, %v1368
    %v1370 = vrot.slane %v1355, %v1369
    %v1372 = vunpack.c.l.s4 1966171168
    %v1373 = vunpack.c.0.s8 %v1372
    %v1374 = vlaneseq
    %v1375 = vshrl.u32 %v1374, 7
    %v1376 = vsub.s32 %v1373, %v1375
    %v1377 = vrot.slane %v1362, %v1376
    %v1379 = vunpack.c.l.s4 1966171168
    %v1380 = vunpack.c.0.s8 %v1379
    %v1381 = vlaneseq
    %v1382 = vshrl.u32 %v1381, 7
    %v1383 = vsub.s32 %v1380, %v1382
    %v1384 = vrot.slane %v1363, %v1383
    %v1385 = vcombine.high %v1370, %v1370
    %v1386 = vcombine.high %v1384, %v1384
    %v1387 = vcombine.high %v1099, %v1099
    %v1389 = vunpack.c.l.s4 1966171168
    %v1390 = vunpack.c.0.s8 %v1389
    %v1391 = vlaneseq
    %v1392 = vshrl.u32 %v1391, 7
    %v1393 = vsub.s32 %v1390, %v1392
    %v1394 = vrot.slane %v1099, %v1393
    %v1396 = vunpack.c.l.s4 1966171168
    %v1397 = vunpack.c.0.s8 %v1396
    %v1398 = vlaneseq
    %v1399 = vshrl.u32 %v1398, 7
    %v1400 = vsub.s32 %v1397, %v1399
    %v1401 = vrot.slane %v1387, %v1400
    %v1402 = vcombine.high %v1394, %v1394
    %v1404 = vunpack.c.l.s4 1966171168
    %v1405 = vunpack.c.0.s8 %v1404
    %v1406 = vlaneseq
    %v1407 = vshrl.u32 %v1406, 7
    %v1408 = vsub.s32 %v1405, %v1407
    %v1409 = vrot.slane %v1394, %v1408
    %v1411 = vunpack.c.l.s4 1966171168
    %v1412 = vunpack.c.0.s8 %v1411
    %v1413 = vlaneseq
    %v1414 = vshrl.u32 %v1413, 7
    %v1415 = vsub.s32 %v1412, %v1414
    %v1416 = vrot.slane %v1401, %v1415
    %v1418 = vunpack.c.l.s4 1966171168
    %v1419 = vunpack.c.0.s8 %v1418
    %v1420 = vlaneseq
    %v1421 = vshrl.u32 %v1420, 7
    %v1422 = vsub.s32 %v1419, %v1421
    %v1423 = vrot.slane %v1402, %v1422
    %v1424 = vcombine.high %v1409, %v1409
    %v1425 = vcombine.high %v1423, %v1423
    %v1426 = vcombine.high %v1106, %v1106
    %v1428 = vunpack.c.l.s4 1966171168
    %v1429 = vunpack.c.0.s8 %v1428
    %v1430 = vlaneseq
    %v1431 = vshrl.u32 %v1430, 7
    %v1432 = vsub.s32 %v1429, %v1431
    %v1433 = vrot.slane %v1106, %v1432
    %v1435 = vunpack.c.l.s4 1966171168
    %v1436 = vunpack.c.0.s8 %v1435
    %v1437 = vlaneseq
    %v1438 = vshrl.u32 %v1437, 7
    %v1439 = vsub.s32 %v1436, %v1438
    %v1440 = vrot.slane %v1426, %v1439
    %v1441 = vcombine.high %v1433, %v1433
    %v1443 = vunpack.c.l.s4 1966171168
    %v1444 = vunpack.c.0.s8 %v1443
    %v1445 = vlaneseq
    %v1446 = vshrl.u32 %v1445, 7
    %v1447 = vsub.s32 %v1444, %v1446
    %v1448 = vrot.slane %v1433, %v1447
    %v1450 = vunpack.c.l.s4 1966171168
    %v1451 = vunpack.c.0.s8 %v1450
    %v1452 = vlaneseq
    %v1453 = vshrl.u32 %v1452, 7
    %v1454 = vsub.s32 %v1451, %v1453
    %v1455 = vrot.slane %v1440, %v1454
    %v1457 = vunpack.c.l.s4 1966171168
    %v1458 = vunpack.c.0.s8 %v1457
    %v1459 = vlaneseq
    %v1460 = vshrl.u32 %v1459, 7
    %v1461 = vsub.s32 %v1458, %v1460
    %v1462 = vrot.slane %v1441, %v1461
    %v1463 = vcombine.high %v1448, %v1448
    %v1464 = vcombine.high %v1462, %v1462
    %v1465 = vcombine.high %v1113, %v1113
    %v1467 = vunpack.c.l.s4 1966171168
    %v1468 = vunpack.c.0.s8 %v1467
    %v1469 = vlaneseq
    %v1470 = vshrl.u32 %v1469, 7
    %v1471 = vsub.s32 %v1468, %v1470
    %v1472 = vrot.slane %v1113, %v1471
    %v1474 = vunpack.c.l.s4 1966171168
    %v1475 = vunpack.c.0.s8 %v1474
    %v1476 = vlaneseq
    %v1477 = vshrl.u32 %v1476, 7
    %v1478 = vsub.s32 %v1475, %v1477
    %v1479 = vrot.slane %v1465, %v1478
    %v1480 = vcombine.high %v1472, %v1472
    %v1482 = vunpack.c.l.s4 1966171168
    %v1483 = vunpack.c.0.s8 %v1482
    %v1484 = vlaneseq
    %v1485 = vshrl.u32 %v1484, 7
    %v1486 = vsub.s32 %v1483, %v1485
    %v1487 = vrot.slane %v1472, %v1486
    %v1489 = vunpack.c.l.s4 1966171168
    %v1490 = vunpack.c.0.s8 %v1489
    %v1491 = vlaneseq
    %v1492 = vshrl.u32 %v1491, 7
    %v1493 = vsub.s32 %v1490, %v1492
    %v1494 = vrot.slane %v1479, %v1493
    %v1496 = vunpack.c.l.s4 1966171168
    %v1497 = vunpack.c.0.s8 %v1496
    %v1498 = vlaneseq
    %v1499 = vshrl.u32 %v1498, 7
    %v1500 = vsub.s32 %v1497, %v1499
    %v1501 = vrot.slane %v1480, %v1500
    %v1502 = vcombine.high %v1487, %v1487
    %v1503 = vcombine.high %v1501, %v1501
    %v1554 = vsub.f32 %v204, %v1136
    %v1555 = vsub.f32 %v208, %v1150
    %v1556 = vsub.f32 %v212, %v1151
    %v1557 = vsub.f32 %v216, %v1152
    %v1558 = vsub.f32 %v220, %v1143
    %v1559 = vsub.f32 %v224, %v1175
    %v1560 = vsub.f32 %v228, %v1189
    %v1561 = vsub.f32 %v232, %v1190
    %v1562 = vsub.f32 %v236, %v1191
    %v1563 = vsub.f32 %v240, %v1182
    %v1564 = vsub.f32 %v244, %v1214
    %v1565 = vsub.f32 %v248, %v1228
    %v1566 = vsub.f32 %v252, %v1229
    %v1567 = vsub.f32 %v256, %v1230
    %v1568 = vsub.f32 %v260, %v1221
    %v1569 = vsub.f32 %v264, %v1253
    %v1570 = vsub.f32 %v268, %v1267
    %v1571 = vsub.f32 %v272, %v1268
    %v1572 = vsub.f32 %v276, %v1269
    %v1573 = vsub.f32 %v280, %v1260
    %v1574 = vsub.f32 %v284, %v1292
    %v1575 = vsub.f32 %v288, %v1306
    %v1576 = vsub.f32 %v292, %v1307
    %v1577 = vsub.f32 %v296, %v1308
    %v1578 = vsub.f32 %v300, %v1299
    %v1579 = vsub.f32 %v304, %v1331
    %v1580 = vsub.f32 %v308, %v1345
    %v1581 = vsub.f32 %v312, %v1346
    %v1582 = vsub.f32 %v316, %v1347
    %v1583 = vsub.f32 %v320, %v1338
    %v1584 = vsub.f32 %v324, %v1370
    %v1585 = vsub.f32 %v328, %v1384
    %v1586 = vsub.f32 %v332, %v1385
    %v1587 = vsub.f32 %v336, %v1386
    %v1588 = vsub.f32 %v340, %v1377
    %v1589 = vsub.f32 %v344, %v1409
    %v1590 = vsub.f32 %v348, %v1423
    %v1591 = vsub.f32 %v352, %v1424
    %v1592 = vsub.f32 %v356, %v1425
    %v1593 = vsub.f32 %v360, %v1416
    %v1594 = vsub.f32 %v364, %v1448
    %v1595 = vsub.f32 %v368, %v1462
    %v1596 = vsub.f32 %v372, %v1463
    %v1597 = vsub.f32 %v376, %v1464
    %v1598 = vsub.f32 %v380, %v1455
    %v1599 = vsub.f32 %v384, %v1487
    %v1600 = vsub.f32 %v388, %v1501
    %v1601 = vsub.f32 %v392, %v1502
    %v1602 = vsub.f32 %v396, %v1503
    %v1603 = vsub.f32 %v400, %v1494
    %v1604 = vmul.f32 %v1554, 1.442695
    %v1605 = vpow.pop %v1604
    %v1606 = vmul.f32 %v1555, 1.442695
    %v1607 = vpow.pop %v1606
    %v1608 = vmul.f32 %v1556, 1.442695
    %v1609 = vpow.pop %v1608
    %v1610 = vmul.f32 %v1557, 1.442695
    %v1611 = vpow.pop %v1610
    %v1612 = vmul.f32 %v1558, 1.442695
    %v1613 = vpow.pop %v1612
    %v1614 = vmul.f32 %v1559, 1.442695
    %v1615 = vpow.pop %v1614
    %v1616 = vmul.f32 %v1560, 1.442695
    %v1617 = vpow.pop %v1616
    %v1618 = vmul.f32 %v1561, 1.442695
    %v1619 = vpow.pop %v1618
    %v1620 = vmul.f32 %v1562, 1.442695
    %v1621 = vpow.pop %v1620
    %v1622 = vmul.f32 %v1563, 1.442695
    %v1623 = vpow.pop %v1622
    %v1624 = vmul.f32 %v1564, 1.442695
    %v1625 = vpow.pop %v1624
    %v1626 = vmul.f32 %v1565, 1.442695
    %v1627 = vpow.pop %v1626
    %v1628 = vmul.f32 %v1566, 1.442695
    %v1629 = vpow.pop %v1628
    %v1630 = vmul.f32 %v1567, 1.442695
    %v1631 = vpow.pop %v1630
    %v1632 = vmul.f32 %v1568, 1.442695
    %v1633 = vpow.pop %v1632
    %v1634 = vmul.f32 %v1569, 1.442695
    %v1635 = vpow.pop %v1634
    %v1636 = vmul.f32 %v1570, 1.442695
    %v1637 = vpow.pop %v1636
    %v1638 = vmul.f32 %v1571, 1.442695
    %v1639 = vpow.pop %v1638
    %v1640 = vmul.f32 %v1572, 1.442695
    %v1641 = vpow.pop %v1640
    %v1642 = vmul.f32 %v1573, 1.442695
    %v1643 = vpow.pop %v1642
    %v1644 = vmul.f32 %v1574, 1.442695
    %v1645 = vpow.pop %v1644
    %v1646 = vmul.f32 %v1575, 1.442695
    %v1647 = vpow.pop %v1646
    %v1648 = vmul.f32 %v1576, 1.442695
    %v1649 = vpow.pop %v1648
    %v1650 = vmul.f32 %v1577, 1.442695
    %v1651 = vpow.pop %v1650
    %v1652 = vmul.f32 %v1578, 1.442695
    %v1653 = vpow.pop %v1652
    %v1654 = vmul.f32 %v1579, 1.442695
    %v1655 = vpow.pop %v1654
    %v1656 = vmul.f32 %v1580, 1.442695
    %v1657 = vpow.pop %v1656
    %v1658 = vmul.f32 %v1581, 1.442695
    %v1659 = vpow.pop %v1658
    %v1660 = vmul.f32 %v1582, 1.442695
    %v1661 = vpow.pop %v1660
    %v1662 = vmul.f32 %v1583, 1.442695
    %v1663 = vpow.pop %v1662
    %v1664 = vmul.f32 %v1584, 1.442695
    %v1665 = vpow.pop %v1664
    %v1666 = vmul.f32 %v1585, 1.442695
    %v1667 = vpow.pop %v1666
    %v1668 = vmul.f32 %v1586, 1.442695
    %v1669 = vpow.pop %v1668
    %v1670 = vmul.f32 %v1587, 1.442695
    %v1671 = vpow.pop %v1670
    %v1672 = vmul.f32 %v1588, 1.442695
    %v1673 = vpow.pop %v1672
    %v1674 = vmul.f32 %v1589, 1.442695
    %v1675 = vpow.pop %v1674
    %v1676 = vmul.f32 %v1590, 1.442695
    %v1677 = vpow.pop %v1676
    %v1678 = vmul.f32 %v1591, 1.442695
    %v1679 = vpow.pop %v1678
    %v1680 = vmul.f32 %v1592, 1.442695
    %v1681 = vpow.pop %v1680
    %v1682 = vmul.f32 %v1593, 1.442695
    %v1683 = vpow.pop %v1682
    %v1684 = vmul.f32 %v1594, 1.442695
    %v1685 = vpow.pop %v1684
    %v1686 = vmul.f32 %v1595, 1.442695
    %v1687 = vpow.pop %v1686
    %v1688 = vmul.f32 %v1596, 1.442695
    %v1689 = vpow.pop %v1688
    %v1690 = vmul.f32 %v1597, 1.442695
    %v1691 = vpow.pop %v1690
    %v1692 = vmul.f32 %v1598, 1.442695
    %v1693 = vpow.pop %v1692
    %v1694 = vmul.f32 %v1599, 1.442695
    %v1695 = vpow.pop %v1694
    %v1696 = vmul.f32 %v1600, 1.442695
    %v1697 = vpow.pop %v1696
    %v1698 = vmul.f32 %v1601, 1.442695
    %v1699 = vpow.pop %v1698
    %v1700 = vmul.f32 %v1602, 1.442695
    %v1701 = vpow.pop %v1700
    %v1702 = vmul.f32 %v1603, 1.442695
    %v1703 = vpow.pop %v1702
    %v1754 = vcombine.low %v1605, %v1607
    %v1755 = vcombine.low %v1609, %v1611
    %v1757 = vunpack.c.l.s4 1966171168
    %v1758 = vunpack.c.0.s8 %v1757
    %v1759 = vlaneseq
    %v1760 = vshrl.u32 %v1759, 7
    %v1761 = vsub.s32 %v1758, %v1760
    %v1762 = vrot.slane %v1754, %v1761
    %v1764 = vunpack.c.l.s4 1966171168
    %v1765 = vunpack.c.0.s8 %v1764
    %v1766 = vlaneseq
    %v1767 = vshrl.u32 %v1766, 7
    %v1768 = vsub.s32 %v1765, %v1767
    %v1769 = vrot.slane %v1755, %v1768
    %v1771 = vunpack.c.l.s4 1966171168
    %v1772 = vunpack.c.0.s8 %v1771
    %v1773 = vlaneseq
    %v1774 = vshrl.u32 %v1773, 7
    %v1775 = vsub.s32 %v1772, %v1774
    %v1776 = vrot.slane %v1613, %v1775
    %v1777 = vcombine.low %v1762, %v1769
    %v1779 = vunpack.c.l.s4 1966171168
    %v1780 = vunpack.c.0.s8 %v1779
    %v1781 = vlaneseq
    %v1782 = vshrl.u32 %v1781, 7
    %v1783 = vsub.s32 %v1780, %v1782
    %v1784 = vrot.slane %v1777, %v1783
    %v1786 = vunpack.c.l.s4 1966171168
    %v1787 = vunpack.c.0.s8 %v1786
    %v1788 = vlaneseq
    %v1789 = vshrl.u32 %v1788, 7
    %v1790 = vsub.s32 %v1787, %v1789
    %v1791 = vrot.slane %v1776, %v1790
    %v1792 = vcombine.low %v1784, %v1791
    %v1793 = vcombine.low %v1615, %v1617
    %v1794 = vcombine.low %v1619, %v1621
    %v1796 = vunpack.c.l.s4 1966171168
    %v1797 = vunpack.c.0.s8 %v1796
    %v1798 = vlaneseq
    %v1799 = vshrl.u32 %v1798, 7
    %v1800 = vsub.s32 %v1797, %v1799
    %v1801 = vrot.slane %v1793, %v1800
    %v1803 = vunpack.c.l.s4 1966171168
    %v1804 = vunpack.c.0.s8 %v1803
    %v1805 = vlaneseq
    %v1806 = vshrl.u32 %v1805, 7
    %v1807 = vsub.s32 %v1804, %v1806
    %v1808 = vrot.slane %v1794, %v1807
    %v1810 = vunpack.c.l.s4 1966171168
    %v1811 = vunpack.c.0.s8 %v1810
    %v1812 = vlaneseq
    %v1813 = vshrl.u32 %v1812, 7
    %v1814 = vsub.s32 %v1811, %v1813
    %v1815 = vrot.slane %v1623, %v1814
    %v1816 = vcombine.low %v1801, %v1808
    %v1818 = vunpack.c.l.s4 1966171168
    %v1819 = vunpack.c.0.s8 %v1818
    %v1820 = vlaneseq
    %v1821 = vshrl.u32 %v1820, 7
    %v1822 = vsub.s32 %v1819, %v1821
    %v1823 = vrot.slane %v1816, %v1822
    %v1825 = vunpack.c.l.s4 1966171168
    %v1826 = vunpack.c.0.s8 %v1825
    %v1827 = vlaneseq
    %v1828 = vshrl.u32 %v1827, 7
    %v1829 = vsub.s32 %v1826, %v1828
    %v1830 = vrot.slane %v1815, %v1829
    %v1831 = vcombine.low %v1823, %v1830
    %v1832 = vcombine.low %v1625, %v1627
    %v1833 = vcombine.low %v1629, %v1631
    %v1835 = vunpack.c.l.s4 1966171168
    %v1836 = vunpack.c.0.s8 %v1835
    %v1837 = vlaneseq
    %v1838 = vshrl.u32 %v1837, 7
    %v1839 = vsub.s32 %v1836, %v1838
    %v1840 = vrot.slane %v1832, %v1839
    %v1842 = vunpack.c.l.s4 1966171168
    %v1843 = vunpack.c.0.s8 %v1842
    %v1844 = vlaneseq
    %v1845 = vshrl.u32 %v1844, 7
    %v1846 = vsub.s32 %v1843, %v1845
    %v1847 = vrot.slane %v1833, %v1846
    %v1849 = vunpack.c.l.s4 1966171168
    %v1850 = vunpack.c.0.s8 %v1849
    %v1851 = vlaneseq
    %v1852 = vshrl.u32 %v1851, 7
    %v1853 = vsub.s32 %v1850, %v1852
    %v1854 = vrot.slane %v1633, %v1853
    %v1855 = vcombine.low %v1840, %v1847
    %v1857 = vunpack.c.l.s4 1966171168
    %v1858 = vunpack.c.0.s8 %v1857
    %v1859 = vlaneseq
    %v1860 = vshrl.u32 %v1859, 7
    %v1861 = vsub.s32 %v1858, %v1860
    %v1862 = vrot.slane %v1855, %v1861
    %v1864 = vunpack.c.l.s4 1966171168
    %v1865 = vunpack.c.0.s8 %v1864
    %v1866 = vlaneseq
    %v1867 = vshrl.u32 %v1866, 7
    %v1868 = vsub.s32 %v1865, %v1867
    %v1869 = vrot.slane %v1854, %v1868
    %v1870 = vcombine.low %v1862, %v1869
    %v1871 = vcombine.low %v1635, %v1637
    %v1872 = vcombine.low %v1639, %v1641
    %v1874 = vunpack.c.l.s4 1966171168
    %v1875 = vunpack.c.0.s8 %v1874
    %v1876 = vlaneseq
    %v1877 = vshrl.u32 %v1876, 7
    %v1878 = vsub.s32 %v1875, %v1877
    %v1879 = vrot.slane %v1871, %v1878
    %v1881 = vunpack.c.l.s4 1966171168
    %v1882 = vunpack.c.0.s8 %v1881
    %v1883 = vlaneseq
    %v1884 = vshrl.u32 %v1883, 7
    %v1885 = vsub.s32 %v1882, %v1884
    %v1886 = vrot.slane %v1872, %v1885
    %v1888 = vunpack.c.l.s4 1966171168
    %v1889 = vunpack.c.0.s8 %v1888
    %v1890 = vlaneseq
    %v1891 = vshrl.u32 %v1890, 7
    %v1892 = vsub.s32 %v1889, %v1891
    %v1893 = vrot.slane %v1643, %v1892
    %v1894 = vcombine.low %v1879, %v1886
    %v1896 = vunpack.c.l.s4 1966171168
    %v1897 = vunpack.c.0.s8 %v1896
    %v1898 = vlaneseq
    %v1899 = vshrl.u32 %v1898, 7
    %v1900 = vsub.s32 %v1897, %v1899
    %v1901 = vrot.slane %v1894, %v1900
    %v1903 = vunpack.c.l.s4 1966171168
    %v1904 = vunpack.c.0.s8 %v1903
    %v1905 = vlaneseq
    %v1906 = vshrl.u32 %v1905, 7
    %v1907 = vsub.s32 %v1904, %v1906
    %v1908 = vrot.slane %v1893, %v1907
    %v1909 = vcombine.low %v1901, %v1908
    %v1910 = vcombine.low %v1645, %v1647
    %v1911 = vcombine.low %v1649, %v1651
    %v1913 = vunpack.c.l.s4 1966171168
    %v1914 = vunpack.c.0.s8 %v1913
    %v1915 = vlaneseq
    %v1916 = vshrl.u32 %v1915, 7
    %v1917 = vsub.s32 %v1914, %v1916
    %v1918 = vrot.slane %v1910, %v1917
    %v1920 = vunpack.c.l.s4 1966171168
    %v1921 = vunpack.c.0.s8 %v1920
    %v1922 = vlaneseq
    %v1923 = vshrl.u32 %v1922, 7
    %v1924 = vsub.s32 %v1921, %v1923
    %v1925 = vrot.slane %v1911, %v1924
    %v1927 = vunpack.c.l.s4 1966171168
    %v1928 = vunpack.c.0.s8 %v1927
    %v1929 = vlaneseq
    %v1930 = vshrl.u32 %v1929, 7
    %v1931 = vsub.s32 %v1928, %v1930
    %v1932 = vrot.slane %v1653, %v1931
    %v1933 = vcombine.low %v1918, %v1925
    %v1935 = vunpack.c.l.s4 1966171168
    %v1936 = vunpack.c.0.s8 %v1935
    %v1937 = vlaneseq
    %v1938 = vshrl.u32 %v1937, 7
    %v1939 = vsub.s32 %v1936, %v1938
    %v1940 = vrot.slane %v1933, %v1939
    %v1942 = vunpack.c.l.s4 1966171168
    %v1943 = vunpack.c.0.s8 %v1942
    %v1944 = vlaneseq
    %v1945 = vshrl.u32 %v1944, 7
    %v1946 = vsub.s32 %v1943, %v1945
    %v1947 = vrot.slane %v1932, %v1946
    %v1948 = vcombine.low %v1940, %v1947
    %v1949 = vcombine.low %v1655, %v1657
    %v1950 = vcombine.low %v1659, %v1661
    %v1952 = vunpack.c.l.s4 1966171168
    %v1953 = vunpack.c.0.s8 %v1952
    %v1954 = vlaneseq
    %v1955 = vshrl.u32 %v1954, 7
    %v1956 = vsub.s32 %v1953, %v1955
    %v1957 = vrot.slane %v1949, %v1956
    %v1959 = vunpack.c.l.s4 1966171168
    %v1960 = vunpack.c.0.s8 %v1959
    %v1961 = vlaneseq
    %v1962 = vshrl.u32 %v1961, 7
    %v1963 = vsub.s32 %v1960, %v1962
    %v1964 = vrot.slane %v1950, %v1963
    %v1966 = vunpack.c.l.s4 1966171168
    %v1967 = vunpack.c.0.s8 %v1966
    %v1968 = vlaneseq
    %v1969 = vshrl.u32 %v1968, 7
    %v1970 = vsub.s32 %v1967, %v1969
    %v1971 = vrot.slane %v1663, %v1970
    %v1972 = vcombine.low %v1957, %v1964
    %v1974 = vunpack.c.l.s4 1966171168
    %v1975 = vunpack.c.0.s8 %v1974
    %v1976 = vlaneseq
    %v1977 = vshrl.u32 %v1976, 7
    %v1978 = vsub.s32 %v1975, %v1977
    %v1979 = vrot.slane %v1972, %v1978
    %v1981 = vunpack.c.l.s4 1966171168
    %v1982 = vunpack.c.0.s8 %v1981
    %v1983 = vlaneseq
    %v1984 = vshrl.u32 %v1983, 7
    %v1985 = vsub.s32 %v1982, %v1984
    %v1986 = vrot.slane %v1971, %v1985
    %v1987 = vcombine.low %v1979, %v1986
    %v1988 = vcombine.low %v1665, %v1667
    %v1989 = vcombine.low %v1669, %v1671
    %v1991 = vunpack.c.l.s4 1966171168
    %v1992 = vunpack.c.0.s8 %v1991
    %v1993 = vlaneseq
    %v1994 = vshrl.u32 %v1993, 7
    %v1995 = vsub.s32 %v1992, %v1994
    %v1996 = vrot.slane %v1988, %v1995
    %v1998 = vunpack.c.l.s4 1966171168
    %v1999 = vunpack.c.0.s8 %v1998
    %v2000 = vlaneseq
    %v2001 = vshrl.u32 %v2000, 7
    %v2002 = vsub.s32 %v1999, %v2001
    %v2003 = vrot.slane %v1989, %v2002
    %v2005 = vunpack.c.l.s4 1966171168
    %v2006 = vunpack.c.0.s8 %v2005
    %v2007 = vlaneseq
    %v2008 = vshrl.u32 %v2007, 7
    %v2009 = vsub.s32 %v2006, %v2008
    %v2010 = vrot.slane %v1673, %v2009
    %v2011 = vcombine.low %v1996, %v2003
    %v2013 = vunpack.c.l.s4 1966171168
    %v2014 = vunpack.c.0.s8 %v2013
    %v2015 = vlaneseq
    %v2016 = vshrl.u32 %v2015, 7
    %v2017 = vsub.s32 %v2014, %v2016
    %v2018 = vrot.slane %v2011, %v2017
    %v2020 = vunpack.c.l.s4 1966171168
    %v2021 = vunpack.c.0.s8 %v2020
    %v2022 = vlaneseq
    %v2023 = vshrl.u32 %v2022, 7
    %v2024 = vsub.s32 %v2021, %v2023
    %v2025 = vrot.slane %v2010, %v2024
    %v2026 = vcombine.low %v2018, %v2025
    %v2027 = vcombine.low %v1675, %v1677
    %v2028 = vcombine.low %v1679, %v1681
    %v2030 = vunpack.c.l.s4 1966171168
    %v2031 = vunpack.c.0.s8 %v2030
    %v2032 = vlaneseq
    %v2033 = vshrl.u32 %v2032, 7
    %v2034 = vsub.s32 %v2031, %v2033
    %v2035 = vrot.slane %v2027, %v2034
    %v2037 = vunpack.c.l.s4 1966171168
    %v2038 = vunpack.c.0.s8 %v2037
    %v2039 = vlaneseq
    %v2040 = vshrl.u32 %v2039, 7
    %v2041 = vsub.s32 %v2038, %v2040
    %v2042 = vrot.slane %v2028, %v2041
    %v2044 = vunpack.c.l.s4 1966171168
    %v2045 = vunpack.c.0.s8 %v2044
    %v2046 = vlaneseq
    %v2047 = vshrl.u32 %v2046, 7
    %v2048 = vsub.s32 %v2045, %v2047
    %v2049 = vrot.slane %v1683, %v2048
    %v2050 = vcombine.low %v2035, %v2042
    %v2052 = vunpack.c.l.s4 1966171168
    %v2053 = vunpack.c.0.s8 %v2052
    %v2054 = vlaneseq
    %v2055 = vshrl.u32 %v2054, 7
    %v2056 = vsub.s32 %v2053, %v2055
    %v2057 = vrot.slane %v2050, %v2056
    %v2059 = vunpack.c.l.s4 1966171168
    %v2060 = vunpack.c.0.s8 %v2059
    %v2061 = vlaneseq
    %v2062 = vshrl.u32 %v2061, 7
    %v2063 = vsub.s32 %v2060, %v2062
    %v2064 = vrot.slane %v2049, %v2063
    %v2065 = vcombine.low %v2057, %v2064
    %v2066 = vcombine.low %v1685, %v1687
    %v2067 = vcombine.low %v1689, %v1691
    %v2069 = vunpack.c.l.s4 1966171168
    %v2070 = vunpack.c.0.s8 %v2069
    %v2071 = vlaneseq
    %v2072 = vshrl.u32 %v2071, 7
    %v2073 = vsub.s32 %v2070, %v2072
    %v2074 = vrot.slane %v2066, %v2073
    %v2076 = vunpack.c.l.s4 1966171168
    %v2077 = vunpack.c.0.s8 %v2076
    %v2078 = vlaneseq
    %v2079 = vshrl.u32 %v2078, 7
    %v2080 = vsub.s32 %v2077, %v2079
    %v2081 = vrot.slane %v2067, %v2080
    %v2083 = vunpack.c.l.s4 1966171168
    %v2084 = vunpack.c.0.s8 %v2083
    %v2085 = vlaneseq
    %v2086 = vshrl.u32 %v2085, 7
    %v2087 = vsub.s32 %v2084, %v2086
    %v2088 = vrot.slane %v1693, %v2087
    %v2089 = vcombine.low %v2074, %v2081
    %v2091 = vunpack.c.l.s4 1966171168
    %v2092 = vunpack.c.0.s8 %v2091
    %v2093 = vlaneseq
    %v2094 = vshrl.u32 %v2093, 7
    %v2095 = vsub.s32 %v2092, %v2094
    %v2096 = vrot.slane %v2089, %v2095
    %v2098 = vunpack.c.l.s4 1966171168
    %v2099 = vunpack.c.0.s8 %v2098
    %v2100 = vlaneseq
    %v2101 = vshrl.u32 %v2100, 7
    %v2102 = vsub.s32 %v2099, %v2101
    %v2103 = vrot.slane %v2088, %v2102
    %v2104 = vcombine.low %v2096, %v2103
    %v2105 = vcombine.low %v1695, %v1697
    %v2106 = vcombine.low %v1699, %v1701
    %v2108 = vunpack.c.l.s4 1966171168
    %v2109 = vunpack.c.0.s8 %v2108
    %v2110 = vlaneseq
    %v2111 = vshrl.u32 %v2110, 7
    %v2112 = vsub.s32 %v2109, %v2111
    %v2113 = vrot.slane %v2105, %v2112
    %v2115 = vunpack.c.l.s4 1966171168
    %v2116 = vunpack.c.0.s8 %v2115
    %v2117 = vlaneseq
    %v2118 = vshrl.u32 %v2117, 7
    %v2119 = vsub.s32 %v2116, %v2118
    %v2120 = vrot.slane %v2106, %v2119
    %v2122 = vunpack.c.l.s4 1966171168
    %v2123 = vunpack.c.0.s8 %v2122
    %v2124 = vlaneseq
    %v2125 = vshrl.u32 %v2124, 7
    %v2126 = vsub.s32 %v2123, %v2125
    %v2127 = vrot.slane %v1703, %v2126
    %v2128 = vcombine.low %v2113, %v2120
    %v2130 = vunpack.c.l.s4 1966171168
    %v2131 = vunpack.c.0.s8 %v2130
    %v2132 = vlaneseq
    %v2133 = vshrl.u32 %v2132, 7
    %v2134 = vsub.s32 %v2131, %v2133
    %v2135 = vrot.slane %v2128, %v2134
    %v2137 = vunpack.c.l.s4 1966171168
    %v2138 = vunpack.c.0.s8 %v2137
    %v2139 = vlaneseq
    %v2140 = vshrl.u32 %v2139, 7
    %v2141 = vsub.s32 %v2138, %v2140
    %v2142 = vrot.slane %v2127, %v2141
    %v2143 = vcombine.low %v2135, %v2142
    %2144 = vset.pattern.permute.xlu0 0
    %2145 = vperm.xlu0 %2144, %v1792
    %v2146 = vpop.permute.xlu0 %2145
    %2147 = vset.pattern.permute.xlu0 0
    %2148 = vperm.xlu0 %2147, %v1831
    %v2149 = vpop.permute.xlu0 %2148
    %2150 = vset.pattern.permute.xlu0 0
    %2151 = vperm.xlu0 %2150, %v1870
    %v2152 = vpop.permute.xlu0 %2151
    %2153 = vset.pattern.permute.xlu0 0
    %2154 = vperm.xlu0 %2153, %v1909
    %v2155 = vpop.permute.xlu0 %2154
    %2156 = vset.pattern.permute.xlu0 0
    %2157 = vperm.xlu0 %2156, %v1948
    %v2158 = vpop.permute.xlu0 %2157
    %2159 = vset.pattern.permute.xlu0 0
    %2160 = vperm.xlu0 %2159, %v1987
    %v2161 = vpop.permute.xlu0 %2160
    %2162 = vset.pattern.permute.xlu0 0
    %2163 = vperm.xlu0 %2162, %v2026
    %v2164 = vpop.permute.xlu0 %2163
    %2165 = vset.pattern.permute.xlu0 0
    %2166 = vperm.xlu0 %2165, %v2065
    %v2167 = vpop.permute.xlu0 %2166
    %2168 = vset.pattern.permute.xlu0 0
    %2169 = vperm.xlu0 %2168, %v2104
    %v2170 = vpop.permute.xlu0 %2169
    %2171 = vset.pattern.permute.xlu0 0
    %2172 = vperm.xlu0 %2171, %v2143
    %v2173 = vpop.permute.xlu0 %2172
    %v2174 = vlaneseq
    %v2175 = vshrl.u32 %v2174, 7
    %v2176 = vsub.s32 %v872, %v2175
    %v2177 = vrot.slane %v2146, %v2176
    %v2178 = vlaneseq
    %v2179 = vshrl.u32 %v2178, 7
    %v2180 = vsub.s32 %v872, %v2179
    %v2181 = vrot.slane %v2149, %v2180
    %v2182 = vlaneseq
    %v2183 = vshrl.u32 %v2182, 7
    %v2184 = vsub.s32 %v872, %v2183
    %v2185 = vrot.slane %v2152, %v2184
    %v2186 = vlaneseq
    %v2187 = vshrl.u32 %v2186, 7
    %v2188 = vsub.s32 %v872, %v2187
    %v2189 = vrot.slane %v2155, %v2188
    %v2190 = vlaneseq
    %v2191 = vshrl.u32 %v2190, 7
    %v2192 = vsub.s32 %v872, %v2191
    %v2193 = vrot.slane %v2158, %v2192
    %v2194 = vlaneseq
    %v2195 = vshrl.u32 %v2194, 7
    %v2196 = vsub.s32 %v872, %v2195
    %v2197 = vrot.slane %v2161, %v2196
    %v2198 = vlaneseq
    %v2199 = vshrl.u32 %v2198, 7
    %v2200 = vsub.s32 %v872, %v2199
    %v2201 = vrot.slane %v2164, %v2200
    %v2202 = vlaneseq
    %v2203 = vshrl.u32 %v2202, 7
    %v2204 = vsub.s32 %v872, %v2203
    %v2205 = vrot.slane %v2167, %v2204
    %v2206 = vlaneseq
    %v2207 = vshrl.u32 %v2206, 7
    %v2208 = vsub.s32 %v872, %v2207
    %v2209 = vrot.slane %v2170, %v2208
    %v2210 = vlaneseq
    %v2211 = vshrl.u32 %v2210, 7
    %v2212 = vsub.s32 %v872, %v2211
    %v2213 = vrot.slane %v2173, %v2212
    %v2214 = vsel %vm913, %v2181, %v2177
    %v2215 = vsel %vm915, %v2185, %v2214
    %v2216 = vsel %vm917, %v2189, %v2215
    %v2217 = vsel %vm919, %v2193, %v2216
    %v2218 = vsel %vm921, %v2197, %v2217
    %v2219 = vsel %vm923, %v2201, %v2218
    %v2220 = vsel %vm925, %v2205, %v2219
    %v2221 = vsel %vm913, %v2213, %v2209
    %v2224 = vsel %vm930, %v2220, 0.0
    %2225 = vadd.xlane.f32.xlu0 %v2224
    %v2226 = vpop.xlane.xlu0 %2225
    %v2227 = vsel %vm934, %v2221, 0.0
    %2228 = vadd.xlane.f32.xlu0 %v2227
    %v2229 = vpop.xlane.xlu0 %2228
    %v2232 = vlaneseq
    %v2233 = vshrl.u32 %v2232, 7
    %v2234 = vsub.s32 0, %v2233
    %v2235 = vrot.slane %v2226, %v2234
    %v2236 = vlaneseq
    %v2237 = vshrl.u32 %v2236, 7
    %v2238 = vsub.s32 1, %v2237
    %v2239 = vrot.slane %v2226, %v2238
    %v2240 = vlaneseq
    %v2241 = vshrl.u32 %v2240, 7
    %v2242 = vsub.s32 2, %v2241
    %v2243 = vrot.slane %v2226, %v2242
    %v2244 = vlaneseq
    %v2245 = vshrl.u32 %v2244, 7
    %v2246 = vsub.s32 3, %v2245
    %v2247 = vrot.slane %v2226, %v2246
    %v2248 = vlaneseq
    %v2249 = vshrl.u32 %v2248, 7
    %v2250 = vsub.s32 4, %v2249
    %v2251 = vrot.slane %v2226, %v2250
    %v2252 = vlaneseq
    %v2253 = vshrl.u32 %v2252, 7
    %v2254 = vsub.s32 5, %v2253
    %v2255 = vrot.slane %v2226, %v2254
    %v2256 = vlaneseq
    %v2257 = vshrl.u32 %v2256, 7
    %v2258 = vsub.s32 6, %v2257
    %v2259 = vrot.slane %v2226, %v2258
    %v2260 = vlaneseq
    %v2261 = vshrl.u32 %v2260, 7
    %v2262 = vsub.s32 7, %v2261
    %v2263 = vrot.slane %v2226, %v2262
    %v2264 = vlaneseq
    %v2265 = vshrl.u32 %v2264, 7
    %v2266 = vsub.s32 0, %v2265
    %v2267 = vrot.slane %v2229, %v2266
    %v2268 = vlaneseq
    %v2269 = vshrl.u32 %v2268, 7
    %v2270 = vsub.s32 1, %v2269
    %v2271 = vrot.slane %v2229, %v2270
    %v2272 = vcombine.low %v2235, %v2239
    %v2273 = vcombine.low %v2243, %v2247
    %v2274 = vcombine.low %v2251, %v2255
    %v2275 = vcombine.low %v2259, %v2263
    %v2277 = vunpack.c.l.s4 1966171168
    %v2278 = vunpack.c.0.s8 %v2277
    %v2279 = vlaneseq
    %v2280 = vshrl.u32 %v2279, 7
    %v2281 = vsub.s32 %v2278, %v2280
    %v2282 = vrot.slane %v2272, %v2281
    %v2284 = vunpack.c.l.s4 1966171168
    %v2285 = vunpack.c.0.s8 %v2284
    %v2286 = vlaneseq
    %v2287 = vshrl.u32 %v2286, 7
    %v2288 = vsub.s32 %v2285, %v2287
    %v2289 = vrot.slane %v2273, %v2288
    %v2291 = vunpack.c.l.s4 1966171168
    %v2292 = vunpack.c.0.s8 %v2291
    %v2293 = vlaneseq
    %v2294 = vshrl.u32 %v2293, 7
    %v2295 = vsub.s32 %v2292, %v2294
    %v2296 = vrot.slane %v2274, %v2295
    %v2298 = vunpack.c.l.s4 1966171168
    %v2299 = vunpack.c.0.s8 %v2298
    %v2300 = vlaneseq
    %v2301 = vshrl.u32 %v2300, 7
    %v2302 = vsub.s32 %v2299, %v2301
    %v2303 = vrot.slane %v2275, %v2302
    %v2304 = vcombine.low %v2282, %v2289
    %v2305 = vcombine.low %v2296, %v2303
    %v2307 = vunpack.c.l.s4 1966171168
    %v2308 = vunpack.c.0.s8 %v2307
    %v2309 = vlaneseq
    %v2310 = vshrl.u32 %v2309, 7
    %v2311 = vsub.s32 %v2308, %v2310
    %v2312 = vrot.slane %v2304, %v2311
    %v2314 = vunpack.c.l.s4 1966171168
    %v2315 = vunpack.c.0.s8 %v2314
    %v2316 = vlaneseq
    %v2317 = vshrl.u32 %v2316, 7
    %v2318 = vsub.s32 %v2315, %v2317
    %v2319 = vrot.slane %v2305, %v2318
    %v2320 = vcombine.low %v2312, %v2319
    %v2321 = vcombine.low %v2267, %v2271
    %v2323 = vunpack.c.l.s4 1966171168
    %v2324 = vunpack.c.0.s8 %v2323
    %v2325 = vlaneseq
    %v2326 = vshrl.u32 %v2325, 7
    %v2327 = vsub.s32 %v2324, %v2326
    %v2328 = vrot.slane %v2321, %v2327
    %v2330 = vunpack.c.l.s4 1966171168
    %v2331 = vunpack.c.0.s8 %v2330
    %v2332 = vlaneseq
    %v2333 = vshrl.u32 %v2332, 7
    %v2334 = vsub.s32 %v2331, %v2333
    %v2335 = vrot.slane %v2328, %v2334
    %v2336 = vlaneseq
    %v2337 = vshrl.u32 %v2336, 7
    %v2338 = vsub.s32 0, %v2337
    %v2339 = vrot.slane %v2320, %v2338
    %2341 = vbcast.lane.b32.xlu0 %v2339, 256
    %v2342 = vpop.permute.xlu0 %2341
    %v2343 = vlaneseq
    %v2344 = vshrl.u32 %v2343, 7
    %v2345 = vsub.s32 1, %v2344
    %v2346 = vrot.slane %v2320, %v2345
    %2348 = vbcast.lane.b32.xlu0 %v2346, 256
    %v2349 = vpop.permute.xlu0 %2348
    %v2350 = vlaneseq
    %v2351 = vshrl.u32 %v2350, 7
    %v2352 = vsub.s32 2, %v2351
    %v2353 = vrot.slane %v2320, %v2352
    %2355 = vbcast.lane.b32.xlu0 %v2353, 256
    %v2356 = vpop.permute.xlu0 %2355
    %v2357 = vlaneseq
    %v2358 = vshrl.u32 %v2357, 7
    %v2359 = vsub.s32 3, %v2358
    %v2360 = vrot.slane %v2320, %v2359
    %2362 = vbcast.lane.b32.xlu0 %v2360, 256
    %v2363 = vpop.permute.xlu0 %2362
    %v2364 = vlaneseq
    %v2365 = vshrl.u32 %v2364, 7
    %v2366 = vsub.s32 4, %v2365
    %v2367 = vrot.slane %v2320, %v2366
    %2369 = vbcast.lane.b32.xlu0 %v2367, 256
    %v2370 = vpop.permute.xlu0 %2369
    %v2371 = vlaneseq
    %v2372 = vshrl.u32 %v2371, 7
    %v2373 = vsub.s32 5, %v2372
    %v2374 = vrot.slane %v2320, %v2373
    %2376 = vbcast.lane.b32.xlu0 %v2374, 256
    %v2377 = vpop.permute.xlu0 %2376
    %v2378 = vlaneseq
    %v2379 = vshrl.u32 %v2378, 7
    %v2380 = vsub.s32 6, %v2379
    %v2381 = vrot.slane %v2320, %v2380
    %2383 = vbcast.lane.b32.xlu0 %v2381, 256
    %v2384 = vpop.permute.xlu0 %2383
    %v2385 = vlaneseq
    %v2386 = vshrl.u32 %v2385, 7
    %v2387 = vsub.s32 7, %v2386
    %v2388 = vrot.slane %v2320, %v2387
    %2390 = vbcast.lane.b32.xlu0 %v2388, 256
    %v2391 = vpop.permute.xlu0 %2390
    %v2392 = vlaneseq
    %v2393 = vshrl.u32 %v2392, 7
    %v2394 = vsub.s32 0, %v2393
    %v2395 = vrot.slane %v2335, %v2394
    %2397 = vbcast.lane.b32.xlu0 %v2395, 256
    %v2398 = vpop.permute.xlu0 %2397
    %v2399 = vlaneseq
    %v2400 = vshrl.u32 %v2399, 7
    %v2401 = vsub.s32 1, %v2400
    %v2402 = vrot.slane %v2335, %v2401
    %2404 = vbcast.lane.b32.xlu0 %v2402, 256
    %v2405 = vpop.permute.xlu0 %2404
    %v2406 = vcombine.high %v2342, %v2342
    %v2408 = vunpack.c.l.s4 1966171168
    %v2409 = vunpack.c.0.s8 %v2408
    %v2410 = vlaneseq
    %v2411 = vshrl.u32 %v2410, 7
    %v2412 = vsub.s32 %v2409, %v2411
    %v2413 = vrot.slane %v2342, %v2412
    %v2415 = vunpack.c.l.s4 1966171168
    %v2416 = vunpack.c.0.s8 %v2415
    %v2417 = vlaneseq
    %v2418 = vshrl.u32 %v2417, 7
    %v2419 = vsub.s32 %v2416, %v2418
    %v2420 = vrot.slane %v2406, %v2419
    %v2421 = vcombine.high %v2413, %v2413
    %v2423 = vunpack.c.l.s4 1966171168
    %v2424 = vunpack.c.0.s8 %v2423
    %v2425 = vlaneseq
    %v2426 = vshrl.u32 %v2425, 7
    %v2427 = vsub.s32 %v2424, %v2426
    %v2428 = vrot.slane %v2413, %v2427
    %v2430 = vunpack.c.l.s4 1966171168
    %v2431 = vunpack.c.0.s8 %v2430
    %v2432 = vlaneseq
    %v2433 = vshrl.u32 %v2432, 7
    %v2434 = vsub.s32 %v2431, %v2433
    %v2435 = vrot.slane %v2420, %v2434
    %v2437 = vunpack.c.l.s4 1966171168
    %v2438 = vunpack.c.0.s8 %v2437
    %v2439 = vlaneseq
    %v2440 = vshrl.u32 %v2439, 7
    %v2441 = vsub.s32 %v2438, %v2440
    %v2442 = vrot.slane %v2421, %v2441
    %v2443 = vcombine.high %v2428, %v2428
    %v2444 = vcombine.high %v2442, %v2442
    %v2445 = vcombine.high %v2349, %v2349
    %v2447 = vunpack.c.l.s4 1966171168
    %v2448 = vunpack.c.0.s8 %v2447
    %v2449 = vlaneseq
    %v2450 = vshrl.u32 %v2449, 7
    %v2451 = vsub.s32 %v2448, %v2450
    %v2452 = vrot.slane %v2349, %v2451
    %v2454 = vunpack.c.l.s4 1966171168
    %v2455 = vunpack.c.0.s8 %v2454
    %v2456 = vlaneseq
    %v2457 = vshrl.u32 %v2456, 7
    %v2458 = vsub.s32 %v2455, %v2457
    %v2459 = vrot.slane %v2445, %v2458
    %v2460 = vcombine.high %v2452, %v2452
    %v2462 = vunpack.c.l.s4 1966171168
    %v2463 = vunpack.c.0.s8 %v2462
    %v2464 = vlaneseq
    %v2465 = vshrl.u32 %v2464, 7
    %v2466 = vsub.s32 %v2463, %v2465
    %v2467 = vrot.slane %v2452, %v2466
    %v2469 = vunpack.c.l.s4 1966171168
    %v2470 = vunpack.c.0.s8 %v2469
    %v2471 = vlaneseq
    %v2472 = vshrl.u32 %v2471, 7
    %v2473 = vsub.s32 %v2470, %v2472
    %v2474 = vrot.slane %v2459, %v2473
    %v2476 = vunpack.c.l.s4 1966171168
    %v2477 = vunpack.c.0.s8 %v2476
    %v2478 = vlaneseq
    %v2479 = vshrl.u32 %v2478, 7
    %v2480 = vsub.s32 %v2477, %v2479
    %v2481 = vrot.slane %v2460, %v2480
    %v2482 = vcombine.high %v2467, %v2467
    %v2483 = vcombine.high %v2481, %v2481
    %v2484 = vcombine.high %v2356, %v2356
    %v2486 = vunpack.c.l.s4 1966171168
    %v2487 = vunpack.c.0.s8 %v2486
    %v2488 = vlaneseq
    %v2489 = vshrl.u32 %v2488, 7
    %v2490 = vsub.s32 %v2487, %v2489
    %v2491 = vrot.slane %v2356, %v2490
    %v2493 = vunpack.c.l.s4 1966171168
    %v2494 = vunpack.c.0.s8 %v2493
    %v2495 = vlaneseq
    %v2496 = vshrl.u32 %v2495, 7
    %v2497 = vsub.s32 %v2494, %v2496
    %v2498 = vrot.slane %v2484, %v2497
    %v2499 = vcombine.high %v2491, %v2491
    %v2501 = vunpack.c.l.s4 1966171168
    %v2502 = vunpack.c.0.s8 %v2501
    %v2503 = vlaneseq
    %v2504 = vshrl.u32 %v2503, 7
    %v2505 = vsub.s32 %v2502, %v2504
    %v2506 = vrot.slane %v2491, %v2505
    %v2508 = vunpack.c.l.s4 1966171168
    %v2509 = vunpack.c.0.s8 %v2508
    %v2510 = vlaneseq
    %v2511 = vshrl.u32 %v2510, 7
    %v2512 = vsub.s32 %v2509, %v2511
    %v2513 = vrot.slane %v2498, %v2512
    %v2515 = vunpack.c.l.s4 1966171168
    %v2516 = vunpack.c.0.s8 %v2515
    %v2517 = vlaneseq
    %v2518 = vshrl.u32 %v2517, 7
    %v2519 = vsub.s32 %v2516, %v2518
    %v2520 = vrot.slane %v2499, %v2519
    %v2521 = vcombine.high %v2506, %v2506
    %v2522 = vcombine.high %v2520, %v2520
    %v2523 = vcombine.high %v2363, %v2363
    %v2525 = vunpack.c.l.s4 1966171168
    %v2526 = vunpack.c.0.s8 %v2525
    %v2527 = vlaneseq
    %v2528 = vshrl.u32 %v2527, 7
    %v2529 = vsub.s32 %v2526, %v2528
    %v2530 = vrot.slane %v2363, %v2529
    %v2532 = vunpack.c.l.s4 1966171168
    %v2533 = vunpack.c.0.s8 %v2532
    %v2534 = vlaneseq
    %v2535 = vshrl.u32 %v2534, 7
    %v2536 = vsub.s32 %v2533, %v2535
    %v2537 = vrot.slane %v2523, %v2536
    %v2538 = vcombine.high %v2530, %v2530
    %v2540 = vunpack.c.l.s4 1966171168
    %v2541 = vunpack.c.0.s8 %v2540
    %v2542 = vlaneseq
    %v2543 = vshrl.u32 %v2542, 7
    %v2544 = vsub.s32 %v2541, %v2543
    %v2545 = vrot.slane %v2530, %v2544
    %v2547 = vunpack.c.l.s4 1966171168
    %v2548 = vunpack.c.0.s8 %v2547
    %v2549 = vlaneseq
    %v2550 = vshrl.u32 %v2549, 7
    %v2551 = vsub.s32 %v2548, %v2550
    %v2552 = vrot.slane %v2537, %v2551
    %v2554 = vunpack.c.l.s4 1966171168
    %v2555 = vunpack.c.0.s8 %v2554
    %v2556 = vlaneseq
    %v2557 = vshrl.u32 %v2556, 7
    %v2558 = vsub.s32 %v2555, %v2557
    %v2559 = vrot.slane %v2538, %v2558
    %v2560 = vcombine.high %v2545, %v2545
    %v2561 = vcombine.high %v2559, %v2559
    %v2562 = vcombine.high %v2370, %v2370
    %v2564 = vunpack.c.l.s4 1966171168
    %v2565 = vunpack.c.0.s8 %v2564
    %v2566 = vlaneseq
    %v2567 = vshrl.u32 %v2566, 7
    %v2568 = vsub.s32 %v2565, %v2567
    %v2569 = vrot.slane %v2370, %v2568
    %v2571 = vunpack.c.l.s4 1966171168
    %v2572 = vunpack.c.0.s8 %v2571
    %v2573 = vlaneseq
    %v2574 = vshrl.u32 %v2573, 7
    %v2575 = vsub.s32 %v2572, %v2574
    %v2576 = vrot.slane %v2562, %v2575
    %v2577 = vcombine.high %v2569, %v2569
    %v2579 = vunpack.c.l.s4 1966171168
    %v2580 = vunpack.c.0.s8 %v2579
    %v2581 = vlaneseq
    %v2582 = vshrl.u32 %v2581, 7
    %v2583 = vsub.s32 %v2580, %v2582
    %v2584 = vrot.slane %v2569, %v2583
    %v2586 = vunpack.c.l.s4 1966171168
    %v2587 = vunpack.c.0.s8 %v2586
    %v2588 = vlaneseq
    %v2589 = vshrl.u32 %v2588, 7
    %v2590 = vsub.s32 %v2587, %v2589
    %v2591 = vrot.slane %v2576, %v2590
    %v2593 = vunpack.c.l.s4 1966171168
    %v2594 = vunpack.c.0.s8 %v2593
    %v2595 = vlaneseq
    %v2596 = vshrl.u32 %v2595, 7
    %v2597 = vsub.s32 %v2594, %v2596
    %v2598 = vrot.slane %v2577, %v2597
    %v2599 = vcombine.high %v2584, %v2584
    %v2600 = vcombine.high %v2598, %v2598
    %v2601 = vcombine.high %v2377, %v2377
    %v2603 = vunpack.c.l.s4 1966171168
    %v2604 = vunpack.c.0.s8 %v2603
    %v2605 = vlaneseq
    %v2606 = vshrl.u32 %v2605, 7
    %v2607 = vsub.s32 %v2604, %v2606
    %v2608 = vrot.slane %v2377, %v2607
    %v2610 = vunpack.c.l.s4 1966171168
    %v2611 = vunpack.c.0.s8 %v2610
    %v2612 = vlaneseq
    %v2613 = vshrl.u32 %v2612, 7
    %v2614 = vsub.s32 %v2611, %v2613
    %v2615 = vrot.slane %v2601, %v2614
    %v2616 = vcombine.high %v2608, %v2608
    %v2618 = vunpack.c.l.s4 1966171168
    %v2619 = vunpack.c.0.s8 %v2618
    %v2620 = vlaneseq
    %v2621 = vshrl.u32 %v2620, 7
    %v2622 = vsub.s32 %v2619, %v2621
    %v2623 = vrot.slane %v2608, %v2622
    %v2625 = vunpack.c.l.s4 1966171168
    %v2626 = vunpack.c.0.s8 %v2625
    %v2627 = vlaneseq
    %v2628 = vshrl.u32 %v2627, 7
    %v2629 = vsub.s32 %v2626, %v2628
    %v2630 = vrot.slane %v2615, %v2629
    %v2632 = vunpack.c.l.s4 1966171168
    %v2633 = vunpack.c.0.s8 %v2632
    %v2634 = vlaneseq
    %v2635 = vshrl.u32 %v2634, 7
    %v2636 = vsub.s32 %v2633, %v2635
    %v2637 = vrot.slane %v2616, %v2636
    %v2638 = vcombine.high %v2623, %v2623
    %v2639 = vcombine.high %v2637, %v2637
    %v2640 = vcombine.high %v2384, %v2384
    %v2642 = vunpack.c.l.s4 1966171168
    %v2643 = vunpack.c.0.s8 %v2642
    %v2644 = vlaneseq
    %v2645 = vshrl.u32 %v2644, 7
    %v2646 = vsub.s32 %v2643, %v2645
    %v2647 = vrot.slane %v2384, %v2646
    %v2649 = vunpack.c.l.s4 1966171168
    %v2650 = vunpack.c.0.s8 %v2649
    %v2651 = vlaneseq
    %v2652 = vshrl.u32 %v2651, 7
    %v2653 = vsub.s32 %v2650, %v2652
    %v2654 = vrot.slane %v2640, %v2653
    %v2655 = vcombine.high %v2647, %v2647
    %v2657 = vunpack.c.l.s4 1966171168
    %v2658 = vunpack.c.0.s8 %v2657
    %v2659 = vlaneseq
    %v2660 = vshrl.u32 %v2659, 7
    %v2661 = vsub.s32 %v2658, %v2660
    %v2662 = vrot.slane %v2647, %v2661
    %v2664 = vunpack.c.l.s4 1966171168
    %v2665 = vunpack.c.0.s8 %v2664
    %v2666 = vlaneseq
    %v2667 = vshrl.u32 %v2666, 7
    %v2668 = vsub.s32 %v2665, %v2667
    %v2669 = vrot.slane %v2654, %v2668
    %v2671 = vunpack.c.l.s4 1966171168
    %v2672 = vunpack.c.0.s8 %v2671
    %v2673 = vlaneseq
    %v2674 = vshrl.u32 %v2673, 7
    %v2675 = vsub.s32 %v2672, %v2674
    %v2676 = vrot.slane %v2655, %v2675
    %v2677 = vcombine.high %v2662, %v2662
    %v2678 = vcombine.high %v2676, %v2676
    %v2679 = vcombine.high %v2391, %v2391
    %v2681 = vunpack.c.l.s4 1966171168
    %v2682 = vunpack.c.0.s8 %v2681
    %v2683 = vlaneseq
    %v2684 = vshrl.u32 %v2683, 7
    %v2685 = vsub.s32 %v2682, %v2684
    %v2686 = vrot.slane %v2391, %v2685
    %v2688 = vunpack.c.l.s4 1966171168
    %v2689 = vunpack.c.0.s8 %v2688
    %v2690 = vlaneseq
    %v2691 = vshrl.u32 %v2690, 7
    %v2692 = vsub.s32 %v2689, %v2691
    %v2693 = vrot.slane %v2679, %v2692
    %v2694 = vcombine.high %v2686, %v2686
    %v2696 = vunpack.c.l.s4 1966171168
    %v2697 = vunpack.c.0.s8 %v2696
    %v2698 = vlaneseq
    %v2699 = vshrl.u32 %v2698, 7
    %v2700 = vsub.s32 %v2697, %v2699
    %v2701 = vrot.slane %v2686, %v2700
    %v2703 = vunpack.c.l.s4 1966171168
    %v2704 = vunpack.c.0.s8 %v2703
    %v2705 = vlaneseq
    %v2706 = vshrl.u32 %v2705, 7
    %v2707 = vsub.s32 %v2704, %v2706
    %v2708 = vrot.slane %v2693, %v2707
    %v2710 = vunpack.c.l.s4 1966171168
    %v2711 = vunpack.c.0.s8 %v2710
    %v2712 = vlaneseq
    %v2713 = vshrl.u32 %v2712, 7
    %v2714 = vsub.s32 %v2711, %v2713
    %v2715 = vrot.slane %v2694, %v2714
    %v2716 = vcombine.high %v2701, %v2701
    %v2717 = vcombine.high %v2715, %v2715
    %v2718 = vcombine.high %v2398, %v2398
    %v2720 = vunpack.c.l.s4 1966171168
    %v2721 = vunpack.c.0.s8 %v2720
    %v2722 = vlaneseq
    %v2723 = vshrl.u32 %v2722, 7
    %v2724 = vsub.s32 %v2721, %v2723
    %v2725 = vrot.slane %v2398, %v2724
    %v2727 = vunpack.c.l.s4 1966171168
    %v2728 = vunpack.c.0.s8 %v2727
    %v2729 = vlaneseq
    %v2730 = vshrl.u32 %v2729, 7
    %v2731 = vsub.s32 %v2728, %v2730
    %v2732 = vrot.slane %v2718, %v2731
    %v2733 = vcombine.high %v2725, %v2725
    %v2735 = vunpack.c.l.s4 1966171168
    %v2736 = vunpack.c.0.s8 %v2735
    %v2737 = vlaneseq
    %v2738 = vshrl.u32 %v2737, 7
    %v2739 = vsub.s32 %v2736, %v2738
    %v2740 = vrot.slane %v2725, %v2739
    %v2742 = vunpack.c.l.s4 1966171168
    %v2743 = vunpack.c.0.s8 %v2742
    %v2744 = vlaneseq
    %v2745 = vshrl.u32 %v2744, 7
    %v2746 = vsub.s32 %v2743, %v2745
    %v2747 = vrot.slane %v2732, %v2746
    %v2749 = vunpack.c.l.s4 1966171168
    %v2750 = vunpack.c.0.s8 %v2749
    %v2751 = vlaneseq
    %v2752 = vshrl.u32 %v2751, 7
    %v2753 = vsub.s32 %v2750, %v2752
    %v2754 = vrot.slane %v2733, %v2753
    %v2755 = vcombine.high %v2740, %v2740
    %v2756 = vcombine.high %v2754, %v2754
    %v2757 = vcombine.high %v2405, %v2405
    %v2759 = vunpack.c.l.s4 1966171168
    %v2760 = vunpack.c.0.s8 %v2759
    %v2761 = vlaneseq
    %v2762 = vshrl.u32 %v2761, 7
    %v2763 = vsub.s32 %v2760, %v2762
    %v2764 = vrot.slane %v2405, %v2763
    %v2766 = vunpack.c.l.s4 1966171168
    %v2767 = vunpack.c.0.s8 %v2766
    %v2768 = vlaneseq
    %v2769 = vshrl.u32 %v2768, 7
    %v2770 = vsub.s32 %v2767, %v2769
    %v2771 = vrot.slane %v2757, %v2770
    %v2772 = vcombine.high %v2764, %v2764
    %v2774 = vunpack.c.l.s4 1966171168
    %v2775 = vunpack.c.0.s8 %v2774
    %v2776 = vlaneseq
    %v2777 = vshrl.u32 %v2776, 7
    %v2778 = vsub.s32 %v2775, %v2777
    %v2779 = vrot.slane %v2764, %v2778
    %v2781 = vunpack.c.l.s4 1966171168
    %v2782 = vunpack.c.0.s8 %v2781
    %v2783 = vlaneseq
    %v2784 = vshrl.u32 %v2783, 7
    %v2785 = vsub.s32 %v2782, %v2784
    %v2786 = vrot.slane %v2771, %v2785
    %v2788 = vunpack.c.l.s4 1966171168
    %v2789 = vunpack.c.0.s8 %v2788
    %v2790 = vlaneseq
    %v2791 = vshrl.u32 %v2790, 7
    %v2792 = vsub.s32 %v2789, %v2791
    %v2793 = vrot.slane %v2772, %v2792
    %v2794 = vcombine.high %v2779, %v2779
    %v2795 = vcombine.high %v2793, %v2793
    %v2846 = vrcp.pop %v2428
    %v2847 = vmul.f32 %v1605, %v2846
    %v2848 = vrcp.pop %v2442
    %v2849 = vmul.f32 %v1607, %v2848
    %v2850 = vrcp.pop %v2443
    %v2851 = vmul.f32 %v1609, %v2850
    %v2852 = vrcp.pop %v2444
    %v2853 = vmul.f32 %v1611, %v2852
    %v2854 = vrcp.pop %v2435
    %v2855 = vmul.f32 %v1613, %v2854
    %v2856 = vrcp.pop %v2467
    %v2857 = vmul.f32 %v1615, %v2856
    %v2858 = vrcp.pop %v2481
    %v2859 = vmul.f32 %v1617, %v2858
    %v2860 = vrcp.pop %v2482
    %v2861 = vmul.f32 %v1619, %v2860
    %v2862 = vrcp.pop %v2483
    %v2863 = vmul.f32 %v1621, %v2862
    %v2864 = vrcp.pop %v2474
    %v2865 = vmul.f32 %v1623, %v2864
    %v2866 = vrcp.pop %v2506
    %v2867 = vmul.f32 %v1625, %v2866
    %v2868 = vrcp.pop %v2520
    %v2869 = vmul.f32 %v1627, %v2868
    %v2870 = vrcp.pop %v2521
    %v2871 = vmul.f32 %v1629, %v2870
    %v2872 = vrcp.pop %v2522
    %v2873 = vmul.f32 %v1631, %v2872
    %v2874 = vrcp.pop %v2513
    %v2875 = vmul.f32 %v1633, %v2874
    %v2876 = vrcp.pop %v2545
    %v2877 = vmul.f32 %v1635, %v2876
    %v2878 = vrcp.pop %v2559
    %v2879 = vmul.f32 %v1637, %v2878
    %v2880 = vrcp.pop %v2560
    %v2881 = vmul.f32 %v1639, %v2880
    %v2882 = vrcp.pop %v2561
    %v2883 = vmul.f32 %v1641, %v2882
    %v2884 = vrcp.pop %v2552
    %v2885 = vmul.f32 %v1643, %v2884
    %v2886 = vrcp.pop %v2584
    %v2887 = vmul.f32 %v1645, %v2886
    %v2888 = vrcp.pop %v2598
    %v2889 = vmul.f32 %v1647, %v2888
    %v2890 = vrcp.pop %v2599
    %v2891 = vmul.f32 %v1649, %v2890
    %v2892 = vrcp.pop %v2600
    %v2893 = vmul.f32 %v1651, %v2892
    %v2894 = vrcp.pop %v2591
    %v2895 = vmul.f32 %v1653, %v2894
    %v2896 = vrcp.pop %v2623
    %v2897 = vmul.f32 %v1655, %v2896
    %v2898 = vrcp.pop %v2637
    %v2899 = vmul.f32 %v1657, %v2898
    %v2900 = vrcp.pop %v2638
    %v2901 = vmul.f32 %v1659, %v2900
    %v2902 = vrcp.pop %v2639
    %v2903 = vmul.f32 %v1661, %v2902
    %v2904 = vrcp.pop %v2630
    %v2905 = vmul.f32 %v1663, %v2904
    %v2906 = vrcp.pop %v2662
    %v2907 = vmul.f32 %v1665, %v2906
    %v2908 = vrcp.pop %v2676
    %v2909 = vmul.f32 %v1667, %v2908
    %v2910 = vrcp.pop %v2677
    %v2911 = vmul.f32 %v1669, %v2910
    %v2912 = vrcp.pop %v2678
    %v2913 = vmul.f32 %v1671, %v2912
    %v2914 = vrcp.pop %v2669
    %v2915 = vmul.f32 %v1673, %v2914
    %v2916 = vrcp.pop %v2701
    %v2917 = vmul.f32 %v1675, %v2916
    %v2918 = vrcp.pop %v2715
    %v2919 = vmul.f32 %v1677, %v2918
    %v2920 = vrcp.pop %v2716
    %v2921 = vmul.f32 %v1679, %v2920
    %v2922 = vrcp.pop %v2717
    %v2923 = vmul.f32 %v1681, %v2922
    %v2924 = vrcp.pop %v2708
    %v2925 = vmul.f32 %v1683, %v2924
    %v2926 = vrcp.pop %v2740
    %v2927 = vmul.f32 %v1685, %v2926
    %v2928 = vrcp.pop %v2754
    %v2929 = vmul.f32 %v1687, %v2928
    %v2930 = vrcp.pop %v2755
    %v2931 = vmul.f32 %v1689, %v2930
    %v2932 = vrcp.pop %v2756
    %v2933 = vmul.f32 %v1691, %v2932
    %v2934 = vrcp.pop %v2747
    %v2935 = vmul.f32 %v1693, %v2934
    %v2936 = vrcp.pop %v2779
    %v2937 = vmul.f32 %v1695, %v2936
    %v2938 = vrcp.pop %v2793
    %v2939 = vmul.f32 %v1697, %v2938
    %v2940 = vrcp.pop %v2794
    %v2941 = vmul.f32 %v1699, %v2940
    %v2942 = vrcp.pop %v2795
    %v2943 = vmul.f32 %v1701, %v2942
    %v2944 = vrcp.pop %v2786
    %v2945 = vmul.f32 %v1703, %v2944
    %v2996 = vcombine.low %v2847, %v2849
    %v2997 = vcombine.low %v2851, %v2853
    %v2998 = vcombine.low %v2855, %v2857
    %v2999 = vcombine.low %v2859, %v2861
    %v3001 = vunpack.c.l.s4 1966171168
    %v3002 = vunpack.c.0.s8 %v3001
    %v3003 = vlaneseq
    %v3004 = vshrl.u32 %v3003, 7
    %v3005 = vsub.s32 %v3002, %v3004
    %v3006 = vrot.slane %v2996, %v3005
    %v3008 = vunpack.c.l.s4 1966171168
    %v3009 = vunpack.c.0.s8 %v3008
    %v3010 = vlaneseq
    %v3011 = vshrl.u32 %v3010, 7
    %v3012 = vsub.s32 %v3009, %v3011
    %v3013 = vrot.slane %v2997, %v3012
    %v3015 = vunpack.c.l.s4 1966171168
    %v3016 = vunpack.c.0.s8 %v3015
    %v3017 = vlaneseq
    %v3018 = vshrl.u32 %v3017, 7
    %v3019 = vsub.s32 %v3016, %v3018
    %v3020 = vrot.slane %v2998, %v3019
    %v3022 = vunpack.c.l.s4 1966171168
    %v3023 = vunpack.c.0.s8 %v3022
    %v3024 = vlaneseq
    %v3025 = vshrl.u32 %v3024, 7
    %v3026 = vsub.s32 %v3023, %v3025
    %v3027 = vrot.slane %v2999, %v3026
    %v3028 = vcombine.low %v3006, %v3013
    %v3029 = vcombine.low %v3020, %v3027
    %v3031 = vunpack.c.l.s4 1966171168
    %v3032 = vunpack.c.0.s8 %v3031
    %v3033 = vlaneseq
    %v3034 = vshrl.u32 %v3033, 7
    %v3035 = vsub.s32 %v3032, %v3034
    %v3036 = vrot.slane %v3028, %v3035
    %v3038 = vunpack.c.l.s4 1966171168
    %v3039 = vunpack.c.0.s8 %v3038
    %v3040 = vlaneseq
    %v3041 = vshrl.u32 %v3040, 7
    %v3042 = vsub.s32 %v3039, %v3041
    %v3043 = vrot.slane %v3029, %v3042
    %v3044 = vcombine.low %v3036, %v3043
    %v3045 = vcombine.low %v2863, %v2865
    %v3046 = vcombine.low %v2867, %v2869
    %v3047 = vcombine.low %v2871, %v2873
    %v3048 = vcombine.low %v2875, %v2877
    %v3050 = vunpack.c.l.s4 1966171168
    %v3051 = vunpack.c.0.s8 %v3050
    %v3052 = vlaneseq
    %v3053 = vshrl.u32 %v3052, 7
    %v3054 = vsub.s32 %v3051, %v3053
    %v3055 = vrot.slane %v3045, %v3054
    %v3057 = vunpack.c.l.s4 1966171168
    %v3058 = vunpack.c.0.s8 %v3057
    %v3059 = vlaneseq
    %v3060 = vshrl.u32 %v3059, 7
    %v3061 = vsub.s32 %v3058, %v3060
    %v3062 = vrot.slane %v3046, %v3061
    %v3064 = vunpack.c.l.s4 1966171168
    %v3065 = vunpack.c.0.s8 %v3064
    %v3066 = vlaneseq
    %v3067 = vshrl.u32 %v3066, 7
    %v3068 = vsub.s32 %v3065, %v3067
    %v3069 = vrot.slane %v3047, %v3068
    %v3071 = vunpack.c.l.s4 1966171168
    %v3072 = vunpack.c.0.s8 %v3071
    %v3073 = vlaneseq
    %v3074 = vshrl.u32 %v3073, 7
    %v3075 = vsub.s32 %v3072, %v3074
    %v3076 = vrot.slane %v3048, %v3075
    %v3077 = vcombine.low %v3055, %v3062
    %v3078 = vcombine.low %v3069, %v3076
    %v3080 = vunpack.c.l.s4 1966171168
    %v3081 = vunpack.c.0.s8 %v3080
    %v3082 = vlaneseq
    %v3083 = vshrl.u32 %v3082, 7
    %v3084 = vsub.s32 %v3081, %v3083
    %v3085 = vrot.slane %v3077, %v3084
    %v3087 = vunpack.c.l.s4 1966171168
    %v3088 = vunpack.c.0.s8 %v3087
    %v3089 = vlaneseq
    %v3090 = vshrl.u32 %v3089, 7
    %v3091 = vsub.s32 %v3088, %v3090
    %v3092 = vrot.slane %v3078, %v3091
    %v3093 = vcombine.low %v3085, %v3092
    %v3094 = vcombine.low %v2879, %v2881
    %v3095 = vcombine.low %v2883, %v2885
    %v3096 = vcombine.low %v2887, %v2889
    %v3097 = vcombine.low %v2891, %v2893
    %v3099 = vunpack.c.l.s4 1966171168
    %v3100 = vunpack.c.0.s8 %v3099
    %v3101 = vlaneseq
    %v3102 = vshrl.u32 %v3101, 7
    %v3103 = vsub.s32 %v3100, %v3102
    %v3104 = vrot.slane %v3094, %v3103
    %v3106 = vunpack.c.l.s4 1966171168
    %v3107 = vunpack.c.0.s8 %v3106
    %v3108 = vlaneseq
    %v3109 = vshrl.u32 %v3108, 7
    %v3110 = vsub.s32 %v3107, %v3109
    %v3111 = vrot.slane %v3095, %v3110
    %v3113 = vunpack.c.l.s4 1966171168
    %v3114 = vunpack.c.0.s8 %v3113
    %v3115 = vlaneseq
    %v3116 = vshrl.u32 %v3115, 7
    %v3117 = vsub.s32 %v3114, %v3116
    %v3118 = vrot.slane %v3096, %v3117
    %v3120 = vunpack.c.l.s4 1966171168
    %v3121 = vunpack.c.0.s8 %v3120
    %v3122 = vlaneseq
    %v3123 = vshrl.u32 %v3122, 7
    %v3124 = vsub.s32 %v3121, %v3123
    %v3125 = vrot.slane %v3097, %v3124
    %v3126 = vcombine.low %v3104, %v3111
    %v3127 = vcombine.low %v3118, %v3125
    %v3129 = vunpack.c.l.s4 1966171168
    %v3130 = vunpack.c.0.s8 %v3129
    %v3131 = vlaneseq
    %v3132 = vshrl.u32 %v3131, 7
    %v3133 = vsub.s32 %v3130, %v3132
    %v3134 = vrot.slane %v3126, %v3133
    %v3136 = vunpack.c.l.s4 1966171168
    %v3137 = vunpack.c.0.s8 %v3136
    %v3138 = vlaneseq
    %v3139 = vshrl.u32 %v3138, 7
    %v3140 = vsub.s32 %v3137, %v3139
    %v3141 = vrot.slane %v3127, %v3140
    %v3142 = vcombine.low %v3134, %v3141
    %v3144 = vunpack.c.l.s4 1966171168
    %v3145 = vunpack.c.0.s8 %v3144
    %v3146 = vlaneseq
    %v3147 = vshrl.u32 %v3146, 7
    %v3148 = vsub.s32 %v3145, %v3147
    %v3149 = vrot.slane %v2895, %v3148
    %v3151 = vunpack.c.l.s4 1966171168
    %v3152 = vunpack.c.0.s8 %v3151
    %v3153 = vlaneseq
    %v3154 = vshrl.u32 %v3153, 7
    %v3155 = vsub.s32 %v3152, %v3154
    %v3156 = vrot.slane %v3149, %v3155
    %v3157 = vcombine.low %v2897, %v2899
    %v3158 = vcombine.low %v2901, %v2903
    %v3159 = vcombine.low %v2905, %v2907
    %v3160 = vcombine.low %v2909, %v2911
    %v3162 = vunpack.c.l.s4 1966171168
    %v3163 = vunpack.c.0.s8 %v3162
    %v3164 = vlaneseq
    %v3165 = vshrl.u32 %v3164, 7
    %v3166 = vsub.s32 %v3163, %v3165
    %v3167 = vrot.slane %v3157, %v3166
    %v3169 = vunpack.c.l.s4 1966171168
    %v3170 = vunpack.c.0.s8 %v3169
    %v3171 = vlaneseq
    %v3172 = vshrl.u32 %v3171, 7
    %v3173 = vsub.s32 %v3170, %v3172
    %v3174 = vrot.slane %v3158, %v3173
    %v3176 = vunpack.c.l.s4 1966171168
    %v3177 = vunpack.c.0.s8 %v3176
    %v3178 = vlaneseq
    %v3179 = vshrl.u32 %v3178, 7
    %v3180 = vsub.s32 %v3177, %v3179
    %v3181 = vrot.slane %v3159, %v3180
    %v3183 = vunpack.c.l.s4 1966171168
    %v3184 = vunpack.c.0.s8 %v3183
    %v3185 = vlaneseq
    %v3186 = vshrl.u32 %v3185, 7
    %v3187 = vsub.s32 %v3184, %v3186
    %v3188 = vrot.slane %v3160, %v3187
    %v3189 = vcombine.low %v3167, %v3174
    %v3190 = vcombine.low %v3181, %v3188
    %v3192 = vunpack.c.l.s4 1966171168
    %v3193 = vunpack.c.0.s8 %v3192
    %v3194 = vlaneseq
    %v3195 = vshrl.u32 %v3194, 7
    %v3196 = vsub.s32 %v3193, %v3195
    %v3197 = vrot.slane %v3189, %v3196
    %v3199 = vunpack.c.l.s4 1966171168
    %v3200 = vunpack.c.0.s8 %v3199
    %v3201 = vlaneseq
    %v3202 = vshrl.u32 %v3201, 7
    %v3203 = vsub.s32 %v3200, %v3202
    %v3204 = vrot.slane %v3190, %v3203
    %v3205 = vcombine.low %v3197, %v3204
    %v3206 = vcombine.low %v2913, %v2915
    %v3207 = vcombine.low %v2917, %v2919
    %v3208 = vcombine.low %v2921, %v2923
    %v3209 = vcombine.low %v2925, %v2927
    %v3211 = vunpack.c.l.s4 1966171168
    %v3212 = vunpack.c.0.s8 %v3211
    %v3213 = vlaneseq
    %v3214 = vshrl.u32 %v3213, 7
    %v3215 = vsub.s32 %v3212, %v3214
    %v3216 = vrot.slane %v3206, %v3215
    %v3218 = vunpack.c.l.s4 1966171168
    %v3219 = vunpack.c.0.s8 %v3218
    %v3220 = vlaneseq
    %v3221 = vshrl.u32 %v3220, 7
    %v3222 = vsub.s32 %v3219, %v3221
    %v3223 = vrot.slane %v3207, %v3222
    %v3225 = vunpack.c.l.s4 1966171168
    %v3226 = vunpack.c.0.s8 %v3225
    %v3227 = vlaneseq
    %v3228 = vshrl.u32 %v3227, 7
    %v3229 = vsub.s32 %v3226, %v3228
    %v3230 = vrot.slane %v3208, %v3229
    %v3232 = vunpack.c.l.s4 1966171168
    %v3233 = vunpack.c.0.s8 %v3232
    %v3234 = vlaneseq
    %v3235 = vshrl.u32 %v3234, 7
    %v3236 = vsub.s32 %v3233, %v3235
    %v3237 = vrot.slane %v3209, %v3236
    %v3238 = vcombine.low %v3216, %v3223
    %v3239 = vcombine.low %v3230, %v3237
    %v3241 = vunpack.c.l.s4 1966171168
    %v3242 = vunpack.c.0.s8 %v3241
    %v3243 = vlaneseq
    %v3244 = vshrl.u32 %v3243, 7
    %v3245 = vsub.s32 %v3242, %v3244
    %v3246 = vrot.slane %v3238, %v3245
    %v3248 = vunpack.c.l.s4 1966171168
    %v3249 = vunpack.c.0.s8 %v3248
    %v3250 = vlaneseq
    %v3251 = vshrl.u32 %v3250, 7
    %v3252 = vsub.s32 %v3249, %v3251
    %v3253 = vrot.slane %v3239, %v3252
    %v3254 = vcombine.low %v3246, %v3253
    %v3255 = vcombine.low %v2929, %v2931
    %v3256 = vcombine.low %v2933, %v2935
    %v3257 = vcombine.low %v2937, %v2939
    %v3258 = vcombine.low %v2941, %v2943
    %v3260 = vunpack.c.l.s4 1966171168
    %v3261 = vunpack.c.0.s8 %v3260
    %v3262 = vlaneseq
    %v3263 = vshrl.u32 %v3262, 7
    %v3264 = vsub.s32 %v3261, %v3263
    %v3265 = vrot.slane %v3255, %v3264
    %v3267 = vunpack.c.l.s4 1966171168
    %v3268 = vunpack.c.0.s8 %v3267
    %v3269 = vlaneseq
    %v3270 = vshrl.u32 %v3269, 7
    %v3271 = vsub.s32 %v3268, %v3270
    %v3272 = vrot.slane %v3256, %v3271
    %v3274 = vunpack.c.l.s4 1966171168
    %v3275 = vunpack.c.0.s8 %v3274
    %v3276 = vlaneseq
    %v3277 = vshrl.u32 %v3276, 7
    %v3278 = vsub.s32 %v3275, %v3277
    %v3279 = vrot.slane %v3257, %v3278
    %v3281 = vunpack.c.l.s4 1966171168
    %v3282 = vunpack.c.0.s8 %v3281
    %v3283 = vlaneseq
    %v3284 = vshrl.u32 %v3283, 7
    %v3285 = vsub.s32 %v3282, %v3284
    %v3286 = vrot.slane %v3258, %v3285
    %v3287 = vcombine.low %v3265, %v3272
    %v3288 = vcombine.low %v3279, %v3286
    %v3290 = vunpack.c.l.s4 1966171168
    %v3291 = vunpack.c.0.s8 %v3290
    %v3292 = vlaneseq
    %v3293 = vshrl.u32 %v3292, 7
    %v3294 = vsub.s32 %v3291, %v3293
    %v3295 = vrot.slane %v3287, %v3294
    %v3297 = vunpack.c.l.s4 1966171168
    %v3298 = vunpack.c.0.s8 %v3297
    %v3299 = vlaneseq
    %v3300 = vshrl.u32 %v3299, 7
    %v3301 = vsub.s32 %v3298, %v3300
    %v3302 = vrot.slane %v3288, %v3301
    %v3303 = vcombine.low %v3295, %v3302
    %v3305 = vunpack.c.l.s4 1966171168
    %v3306 = vunpack.c.0.s8 %v3305
    %v3307 = vlaneseq
    %v3308 = vshrl.u32 %v3307, 7
    %v3309 = vsub.s32 %v3306, %v3308
    %v3310 = vrot.slane %v2945, %v3309
    %v3312 = vunpack.c.l.s4 1966171168
    %v3313 = vunpack.c.0.s8 %v3312
    %v3314 = vlaneseq
    %v3315 = vshrl.u32 %v3314, 7
    %v3316 = vsub.s32 %v3313, %v3315
    %v3317 = vrot.slane %v3310, %v3316
    %3318 = vset.pattern.permute.xlu0 0
    %3319 = vperm.xlu0 %3318, %v3044
    %v3320 = vpop.permute.xlu0 %3319
    %3321 = vset.pattern.permute.xlu0 0
    %3322 = vperm.xlu0 %3321, %v3093
    %v3323 = vpop.permute.xlu0 %3322
    %3324 = vset.pattern.permute.xlu0 0
    %3325 = vperm.xlu0 %3324, %v3142
    %v3326 = vpop.permute.xlu0 %3325
    %3327 = vset.pattern.permute.xlu0 0
    %3328 = vperm.xlu0 %3327, %v3156
    %v3329 = vpop.permute.xlu0 %3328
    %3330 = vset.pattern.permute.xlu0 0
    %3331 = vperm.xlu0 %3330, %v3205
    %v3332 = vpop.permute.xlu0 %3331
    %3333 = vset.pattern.permute.xlu0 0
    %3334 = vperm.xlu0 %3333, %v3254
    %v3335 = vpop.permute.xlu0 %3334
    %3336 = vset.pattern.permute.xlu0 0
    %3337 = vperm.xlu0 %3336, %v3303
    %v3338 = vpop.permute.xlu0 %3337
    %3339 = vset.pattern.permute.xlu0 0
    %3340 = vperm.xlu0 %3339, %v3317
    %v3341 = vpop.permute.xlu0 %3340
    %v3342 = vlaneseq
    %v3343 = vshrl.u32 %v3342, 7
    %v3344 = vsub.s32 %v872, %v3343
    %v3345 = vrot.slane %v3320, %v3344
    %v3346 = vadd.s32 %v872, 4294967288
    %v3347 = vlaneseq
    %v3348 = vshrl.u32 %v3347, 7
    %v3349 = vsub.s32 %v3346, %v3348
    %v3350 = vrot.slane %v3323, %v3349
    %vm3351 = vcmask 130112
    %v3352 = vsel %vm3351, %v3350, %v3345
    %v3353 = vadd.s32 %v872, 4294967280
    %v3354 = vlaneseq
    %v3355 = vshrl.u32 %v3354, 7
    %v3356 = vsub.s32 %v3353, %v3355
    %v3357 = vrot.slane %v3326, %v3356
    %vm3358 = vcmask 195712
    %v3359 = vsel %vm3358, %v3357, %v3352
    %v3360 = vadd.s32 %v872, 4294967272
    %v3361 = vlaneseq
    %v3362 = vshrl.u32 %v3361, 7
    %v3363 = vsub.s32 %v3360, %v3362
    %v3364 = vrot.slane %v3329, %v3363
    %vm3365 = vcmask 261312
    %v3366 = vsel %vm3365, %v3364, %v3359
    %v3367 = vlaneseq
    %v3368 = vshrl.u32 %v3367, 7
    %v3369 = vsub.s32 %v872, %v3368
    %v3370 = vrot.slane %v3332, %v3369
    %v3371 = vlaneseq
    %v3372 = vshrl.u32 %v3371, 7
    %v3373 = vsub.s32 %v3346, %v3372
    %v3374 = vrot.slane %v3335, %v3373
    %v3375 = vsel %vm3351, %v3374, %v3370
    %v3376 = vlaneseq
    %v3377 = vshrl.u32 %v3376, 7
    %v3378 = vsub.s32 %v3353, %v3377
    %v3379 = vrot.slane %v3338, %v3378
    %v3380 = vsel %vm3358, %v3379, %v3375
    %v3381 = vlaneseq
    %v3382 = vshrl.u32 %v3381, 7
    %v3383 = vsub.s32 %v3360, %v3382
    %v3384 = vrot.slane %v3341, %v3383
    %v3385 = vsel %vm3365, %v3384, %v3380
    %v3386 = vsel %vm913, %v3385, %v3366
    %vm3388 = vcmask 197632
    %3389 = vst.msk [vmem:[#allocation2] sm:$0x3] %vm3388, %v3386
    // Predicated region
    $region18: #{tpu_custom_call.1} parent=1 // pred_check
      _
    $region19: #{tpu_custom_call.1} parent=1 // pred_check_branch
      %3391 = sbr.rel (0) target = $region21
    $region20: #{tpu_custom_call.1} parent=1 // pred_region
      %s3393 = ssub.s32 32, 32
      %3394 = vsyncadd [#allocation3], %s3393
      %s3396 = sshll.u32 [#allocation2], 4
      %s3397 = int_to_ptr.vmem [resolvable:$true] %s3396
      %3399 = dma.vmem_to_hbm [thread:$0]  %s3397, 32, %s4, [#allocation3]
    $region21: #{tpu_custom_call.1} parent=1 // pred_fallthru
      _
    // Predicated region
    $region22: #{tpu_custom_call.1} parent=1 // pred_check
      _
    $region23: #{tpu_custom_call.1} parent=1 // pred_check_branch
      %3401 = sbr.rel (0) target = $region25
    $region24: #{tpu_custom_call.1} parent=1 // pred_region
      %3402 = dma.done [#allocation3], 32
    $region25: #{tpu_custom_call.1} parent=1 // pred_fallthru
      _
    %3403 = vsyncpa [#allocation3], 1

</llo_original>
